<compile_context>
chip_gen: v5e
topology: v5e:2x2
jax: 0.10.0
libtpu: 0.0.40
codegen_flags: <defaults>
</compile_context>

<pallas_src>
import numpy as np
import jax
import jax.numpy as jnp
from jax import lax
from jax.experimental import pallas as pl
from jax.experimental.pallas import tpu as pltpu

BN_EPS = 1e-5
LANES = 128  # every conv-layer output is OW*Cout == 128 lanes

# Static conv-trunk architecture: (Cin, Cout, spatial_in) per 3x3/s2/p1 stage.
CONV_CFG = ((3, 16, 16), (16, 32, 8), (32, 64, 4))


def _lane_group_sum(v, group):
    """Sum the 128/group lane-groups of width `group`; result replicated into
    every group.  log2 roll-add butterfly -- the rolls ride the XLU slot."""
    shift = group
    while shift < LANES:
        v = v + pltpu.roll(v, shift, axis=1)
        shift *= 2
    return v


# ------------------------------ fused kernel --------------------------------

def make_fused_cnn_kernel(batch, out_dim):
    """Kernel: x, R1, R2, R3, bn, fc_w, fc_b -> (batch, out_dim).

    Layer-input layout (input and both scratch buffers, bf16):
        (2, Hq*B, W*Cin)   plane p, flat row u*B + b  <->  padded row 2u + p.
    rK_ref : (3, W*Cin, OW*Cout)  banded per-ky weight, horizontal pad folded in.
    bn_ref : (6, 128)  rows (2*li, 2*li+1) = gamma/beta tiled to the 128-lane
             (ow-group, channel) activation layout.
    fcw_ref: (128, out_dim) bf16 = [W^T; W^T] / (OH3*OW3)  (ox-fold + pool scale).
    fcb_ref: (1, out_dim) f32.
    """

    def kernel(x_ref, r1_ref, r2_ref, r3_ref, bn_ref, fcw_ref, fcb_ref,
               o_ref, pad2_ref, pad3_ref):
        r_refs = (r1_ref, r2_ref, r3_ref)
        src_refs = (x_ref, pad2_ref, pad3_ref)

        for li, (_cin, cout, s_in) in enumerate(CONV_CFG):
            oh = s_in // 2
            ow = oh
            k_in = s_in * _cin              # lhs lane width: 48 / 128 / 128
            rows = oh * batch               # matmul M: batch folded in
            src = src_refs[li]
            r = r_refs[li]

            # ---- conv: one batch-folded MXU matmul per vertical tap ky ----
            def tap(ky):
                r0 = (ky // 2) * batch      # contiguous lane-0-aligned slab
                lhs = src[ky % 2, r0:r0 + rows, :]          # (rows, k_in) bf16
                return jnp.dot(lhs, r[ky],
                               preferred_element_type=jnp.float32)

            y = tap(0) + tap(1) + tap(2)                     # (rows, 128) f32

            # ---- BatchNorm2d (training batch stats, two-pass) + ReLU ----
            inv_m = 1.0 / (batch * oh * ow)
            gamma = bn_ref[2 * li:2 * li + 1, :]             # (1, 128) f32
            beta = bn_ref[2 * li + 1:2 * li + 2, :]
            mean = _lane_group_sum(jnp.sum(y, axis=0, keepdims=True),
                                   cout) * inv_m
            yc = y - mean
            var = _lane_group_sum(jnp.sum(yc * yc, axis=0, keepdims=True),
                                  cout) * inv_m
            scale = gamma * lax.rsqrt(var + BN_EPS)
            act = jnp.maximum(yc * scale + beta, 0.0)        # (rows, 128) f32

            if li + 1 < len(CONV_CFG):
                # ---- stage next layer's padded, parity-split input (bf16) ----
                dst = src_refs[li + 1]
                half = (oh // 2) * batch
                # act row = oy*B + b ; even-oy rows -> plane 1, odd-oy -> plane 0.
                even = jnp.concatenate(
                    [act[(2 * q) * batch:(2 * q + 1) * batch, :]
                     for q in range(oh // 2)], axis=0).astype(jnp.bfloat16)
                odd = jnp.concatenate(
                    [act[(2 * q + 1) * batch:(2 * q + 2) * batch, :]
                     for q in range(oh // 2)], axis=0).astype(jnp.bfloat16)
                zrow = jnp.zeros((batch, LANES), jnp.bfloat16)
                dst[1, 0:half, :] = even                     # padded rows 1..oh-1
                dst[1, half:half + batch, :] = zrow          # bottom pad row
                dst[0, 0:batch, :] = zrow                    # top pad row
                dst[0, batch:batch + half, :] = odd          # padded rows 2..oh
            else:
                # ---- AdaptiveAvgPool2d((1,1)) + Linear ----
                # ox-fold + 1/(oh*ow) scale are baked into fcw wrapper-side, so
                # pooling is just the row-sum over oy.
                p = act[0:batch, :]
                for oy in range(1, oh):
                    p = p + act[oy * batch:(oy + 1) * batch, :]
                o_ref[...] = (jnp.dot(p.astype(jnp.bfloat16), fcw_ref[...],
                                      preferred_element_type=jnp.float32)
                              + fcb_ref[...])

    return kernel


# ------------------------------- wrappers ------------------------------------

def _banded_tap_weights(w_oihw, s_in, stride=2, pad=1):
    """Torch (Cout,Cin,3,3) conv weight -> (3, W*Cin, OW*Cout) banded rhs.

    R[ky, x*Cin + c, ox*Cout + d] = W[d, c, ky, kx] where x == stride*ox + kx - pad
    (taps landing on pad columns are omitted -- the zero-padding is folded in).
    """
    cout, cin, kh, kw = w_oihw.shape
    ow = (s_in + 2 * pad - kw) // stride + 1
    w = jnp.transpose(w_oihw, (2, 3, 1, 0))                  # (KH, KW, Cin, Cout)
    x = jnp.arange(s_in)[None, :, None]
    ox = jnp.arange(ow)[None, None, :]
    kx = jnp.arange(kw)[:, None, None]
    sel = (x == stride * ox + kx - pad).astype(w.dtype)      # (KW, W, OW)
    r = jnp.einsum('kxo,ykcd->yxcod', sel, w)                # (KH,W,Cin,OW,Cout)
    return r.reshape(kh, s_in * cin, ow * cout)


@jax.jit
def simple_cnn_forward(x_nchw, params):
    batch, cin, h, w = x_nchw.shape
    assert (cin, h, w) == (CONV_CFG[0][0], CONV_CFG[0][2], CONV_CFG[0][2])
    out_dim = params["fc_w"].shape[0]

    # NCHW -> (parity, Hq*B, W*Cin) bf16: vertical pad only (horizontal pad is
    # folded into the banded rhs), (W, Cin) flattened into lanes, padded-row
    # parity split out as the major dim, batch folded into rows (u-major, b-minor).
    x = jnp.transpose(x_nchw, (0, 2, 3, 1)).reshape(batch, h, w * cin)
    x = jnp.pad(x, ((0, 0), (1, 1), (0, 0)))                 # (B, H+2, W*Cin)
    x = x.reshape(batch, (h + 2) // 2, 2, w * cin)           # [b, u, parity, :]
    x = jnp.transpose(x, (2, 1, 0, 3))                       # (parity, u, b, :)
    x = x.reshape(2, (h + 2) // 2 * batch, w * cin).astype(jnp.bfloat16)

    # Banded per-ky conv weights (bf16).  Conv biases are intentionally dropped:
    # training-mode BN mean-subtraction cancels per-channel constants exactly
    # (would NOT hold for eval-mode running statistics).
    rs = [_banded_tap_weights(wc, s_in).astype(jnp.bfloat16)
          for (wc, _, _, _), (_, _, s_in) in zip(params["convs"], CONV_CFG)]

    # BN gamma/beta pre-replicated into the (ow-group, channel) 128-lane layout.
    bn_rows = []
    for (_, _, g, bb), (_, _cout, s_in) in zip(params["convs"], CONV_CFG):
        ow = s_in // 2
        bn_rows.append(jnp.tile(g, ow))
        bn_rows.append(jnp.tile(bb, ow))
    bn = jnp.stack(bn_rows, axis=0)                          # (6, 128) f32

    # FC weight: duplicate W^T across both 64-lane groups (folds the last
    # layer's ow=2 lane reduction) and bake in the 1/(OH3*OW3) pooling scale.
    oh3 = CONV_CFG[-1][2] // 2
    fcw_t = params["fc_w"].T                                 # (64, out_dim)
    fcw = (jnp.concatenate([fcw_t, fcw_t], axis=0)
           * (1.0 / (oh3 * oh3))).astype(jnp.bfloat16)       # (128, out_dim)
    fcb = params["fc_b"].reshape(1, out_dim)                 # (1, out_dim) f32

    # VMEM scratch for layer-2 / layer-3 padded, parity-split inputs (bf16).
    scratch = []
    for (ncin, _, ns_in) in CONV_CFG[1:]:
        hq = ns_in // 2 + 1
        scratch.append(pltpu.VMEM((2, hq * batch, ns_in * ncin), jnp.bfloat16))

    vmem = lambda: pl.BlockSpec(memory_space=pltpu.MemorySpace.VMEM)
    return pl.pallas_call(
        make_fused_cnn_kernel(batch, out_dim),
        out_shape=jax.ShapeDtypeStruct((batch, out_dim), jnp.float32),
        in_specs=[vmem() for _ in range(7)],
        out_specs=vmem(),
        scratch_shapes=scratch,
    )(x, rs[0], rs[1], rs[2], bn, fcw, fcb)


# ----------------------- deterministic parameter init -----------------------

def init_params(key, out_dim=768):
    keys = jax.random.split(key, 5)

    def conv_init(k, cout, cin):
        k1, k2, k3, k4 = jax.random.split(k, 4)
        wgt = jax.random.normal(k1, (cout, cin, 3, 3), jnp.float32) / jnp.sqrt(cin * 9.0)
        b = jax.random.normal(k2, (cout,), jnp.float32) * 0.1
        gamma = 1.0 + 0.1 * jax.random.normal(k3, (cout,), jnp.float32)
        beta = 0.1 * jax.random.normal(k4, (cout,), jnp.float32)
        return (wgt, b, gamma, beta)

    convs = [conv_init(keys[0], 16, 3),
             conv_init(keys[1], 32, 16),
             conv_init(keys[2], 64, 32)]
    fc_w = jax.random.normal(keys[3], (out_dim, 64), jnp.float32) / jnp.sqrt(64.0)
    fc_b = jax.random.normal(keys[4], (out_dim,), jnp.float32) * 0.01
    return {"convs": convs, "fc_w": fc_w, "fc_b": fc_b}


# ------------------------------ pure-JAX reference ---------------------------

def ref_forward(x_nchw, params):
    x = jnp.transpose(x_nchw, (0, 2, 3, 1))
    for wgt, b, g, bb in params["convs"]:
        w_hwio = jnp.transpose(wgt, (2, 3, 1, 0))
        y = lax.conv_general_dilated(
            x, w_hwio, window_strides=(2, 2), padding=((1, 1), (1, 1)),
            dimension_numbers=("NHWC", "HWIO", "NHWC"),
            precision=lax.Precision.HIGHEST) + b
        mean = jnp.mean(y, axis=(0, 1, 2))
        var = jnp.mean((y - mean) ** 2, axis=(0, 1, 2))
        y = (y - mean) / jnp.sqrt(var + BN_EPS) * g + bb
        x = jnp.maximum(y, 0.0)
    pooled = jnp.mean(x, axis=(1, 2))
    return pooled @ params["fc_w"].T + params["fc_b"]


# ----------------------------------- main ------------------------------------

if __name__ == "__main__":
    key = jax.random.PRNGKey(0)
    kx, kp = jax.random.split(key)
    # PyTorch-style NCHW input: batch=2, channels=3 (fixed by conv1), 16x16.
    x = jax.random.normal(kx, (2, 3, 16, 16), jnp.float32)
    params = init_params(kp, out_dim=768)

    out = simple_cnn_forward(x, params)
    out = jax.block_until_ready(out)
    assert out.shape == (2, 768), out.shape

    ref = ref_forward(x, params)
    np.testing.assert_allclose(np.asarray(out), np.asarray(ref),
                               rtol=5e-2, atol=5e-2)
    print("KERNEL_OK")
</pallas_src>

<mosaic_0001>
module attributes {stable_mosaic.version = 11 : i64} {
  func.func @kernel(%arg0: memref<2x18x48xbf16, #tpu.memory_space<vmem>>, %arg1: memref<3x48x128xbf16, #tpu.memory_space<vmem>>, %arg2: memref<3x128x128xbf16, #tpu.memory_space<vmem>>, %arg3: memref<3x128x128xbf16, #tpu.memory_space<vmem>>, %arg4: memref<6x128xf32, #tpu.memory_space<vmem>>, %arg5: memref<128x768xbf16, #tpu.memory_space<vmem>>, %arg6: memref<1x768xf32, #tpu.memory_space<vmem>>, %arg7: memref<2x768xf32, #tpu.memory_space<vmem>>, %arg8: memref<2x10x128xbf16, #tpu.memory_space<vmem>>, %arg9: memref<2x6x128xbf16, #tpu.memory_space<vmem>>) attributes {dimension_semantics = [], scalar_prefetch = 0 : i64, scratch_operands = 2 : i64, tpu.core_type = #tpu.core_type<tc>} {
    %c0 = arith.constant 0 : index
    %c0_0 = arith.constant 0 : index
    %c0_1 = arith.constant 0 : index
    %0 = vector.load %arg0[%c0, %c0_0, %c0_1] : memref<2x18x48xbf16, #tpu.memory_space<vmem>>, vector<1x16x48xbf16>
    %1 = vector.shape_cast %0 : vector<1x16x48xbf16> to vector<16x48xbf16>
    %c0_2 = arith.constant 0 : index
    %c0_3 = arith.constant 0 : index
    %c0_4 = arith.constant 0 : index
    %2 = vector.load %arg1[%c0_2, %c0_3, %c0_4] : memref<3x48x128xbf16, #tpu.memory_space<vmem>>, vector<1x48x128xbf16>
    %3 = vector.shape_cast %2 : vector<1x48x128xbf16> to vector<48x128xbf16>
    %cst = arith.constant dense<0.000000e+00> : vector<16x128xf32>
    %4 = tpu.matmul %1, %3, %cst {dimension_numbers = #tpu.dot_dimension_numbers<[1], [0], [0], [1], [0, 0, 1, 1], [], []>} : vector<16x48xbf16>, vector<48x128xbf16>, vector<16x128xf32> -> vector<16x128xf32>
    %c1 = arith.constant 1 : index
    %c0_5 = arith.constant 0 : index
    %c0_6 = arith.constant 0 : index
    %5 = vector.load %arg0[%c1, %c0_5, %c0_6] : memref<2x18x48xbf16, #tpu.memory_space<vmem>>, vector<1x16x48xbf16>
    %6 = vector.shape_cast %5 : vector<1x16x48xbf16> to vector<16x48xbf16>
    %c1_7 = arith.constant 1 : index
    %c0_8 = arith.constant 0 : index
    %c0_9 = arith.constant 0 : index
    %7 = vector.load %arg1[%c1_7, %c0_8, %c0_9] : memref<3x48x128xbf16, #tpu.memory_space<vmem>>, vector<1x48x128xbf16>
    %8 = vector.shape_cast %7 : vector<1x48x128xbf16> to vector<48x128xbf16>
    %cst_10 = arith.constant dense<0.000000e+00> : vector<16x128xf32>
    %9 = tpu.matmul %6, %8, %cst_10 {dimension_numbers = #tpu.dot_dimension_numbers<[1], [0], [0], [1], [0, 0, 1, 1], [], []>} : vector<16x48xbf16>, vector<48x128xbf16>, vector<16x128xf32> -> vector<16x128xf32>
    %10 = arith.addf %4, %9 : vector<16x128xf32>
    %c0_11 = arith.constant 0 : index
    %c2 = arith.constant 2 : index
    %c0_12 = arith.constant 0 : index
    %11 = vector.load %arg0[%c0_11, %c2, %c0_12] : memref<2x18x48xbf16, #tpu.memory_space<vmem>>, vector<1x16x48xbf16>
    %12 = vector.shape_cast %11 : vector<1x16x48xbf16> to vector<16x48xbf16>
    %c2_13 = arith.constant 2 : index
    %c0_14 = arith.constant 0 : index
    %c0_15 = arith.constant 0 : index
    %13 = vector.load %arg1[%c2_13, %c0_14, %c0_15] : memref<3x48x128xbf16, #tpu.memory_space<vmem>>, vector<1x48x128xbf16>
    %14 = vector.shape_cast %13 : vector<1x48x128xbf16> to vector<48x128xbf16>
    %cst_16 = arith.constant dense<0.000000e+00> : vector<16x128xf32>
    %15 = tpu.matmul %12, %14, %cst_16 {dimension_numbers = #tpu.dot_dimension_numbers<[1], [0], [0], [1], [0, 0, 1, 1], [], []>} : vector<16x48xbf16>, vector<48x128xbf16>, vector<16x128xf32> -> vector<16x128xf32>
    %16 = arith.addf %10, %15 : vector<16x128xf32>
    %c0_17 = arith.constant 0 : index
    %c0_18 = arith.constant 0 : index
    %17 = vector.load %arg4[%c0_17, %c0_18] : memref<6x128xf32, #tpu.memory_space<vmem>>, vector<1x128xf32>
    %c1_19 = arith.constant 1 : index
    %c0_20 = arith.constant 0 : index
    %18 = vector.load %arg4[%c1_19, %c0_20] : memref<6x128xf32, #tpu.memory_space<vmem>>, vector<1x128xf32>
    %cst_21 = arith.constant dense<0.000000e+00> : vector<128xf32>
    %19 = vector.multi_reduction <add>, %16, %cst_21 [0] : vector<16x128xf32> to vector<128xf32>
    %20 = vector.shape_cast %19 : vector<128xf32> to vector<1x128xf32>
    %c16_i32 = arith.constant 16 : i32
    %21 = tpu.dynamic_rotate %20 by %c16_i32 dim 1 : vector<1x128xf32>, i32 -> vector<1x128xf32>
    %22 = arith.addf %20, %21 : vector<1x128xf32>
    %c32_i32 = arith.constant 32 : i32
    %23 = tpu.dynamic_rotate %22 by %c32_i32 dim 1 : vector<1x128xf32>, i32 -> vector<1x128xf32>
    %24 = arith.addf %22, %23 : vector<1x128xf32>
    %c64_i32 = arith.constant 64 : i32
    %25 = tpu.dynamic_rotate %24 by %c64_i32 dim 1 : vector<1x128xf32>, i32 -> vector<1x128xf32>
    %26 = arith.addf %24, %25 : vector<1x128xf32>
    %cst_22 = arith.constant 7.812500e-03 : f32
    %27 = vector.broadcast %cst_22 : f32 to vector<1x128xf32>
    %28 = arith.mulf %26, %27 : vector<1x128xf32>
    %29 = vector.broadcast %28 : vector<1x128xf32> to vector<16x128xf32>
    %30 = arith.subf %16, %29 : vector<16x128xf32>
    %31 = arith.mulf %30, %30 : vector<16x128xf32>
    %cst_23 = arith.constant dense<0.000000e+00> : vector<128xf32>
    %32 = vector.multi_reduction <add>, %31, %cst_23 [0] : vector<16x128xf32> to vector<128xf32>
    %33 = vector.shape_cast %32 : vector<128xf32> to vector<1x128xf32>
    %c16_i32_24 = arith.constant 16 : i32
    %34 = tpu.dynamic_rotate %33 by %c16_i32_24 dim 1 : vector<1x128xf32>, i32 -> vector<1x128xf32>
    %35 = arith.addf %33, %34 : vector<1x128xf32>
    %c32_i32_25 = arith.constant 32 : i32
    %36 = tpu.dynamic_rotate %35 by %c32_i32_25 dim 1 : vector<1x128xf32>, i32 -> vector<1x128xf32>
    %37 = arith.addf %35, %36 : vector<1x128xf32>
    %c64_i32_26 = arith.constant 64 : i32
    %38 = tpu.dynamic_rotate %37 by %c64_i32_26 dim 1 : vector<1x128xf32>, i32 -> vector<1x128xf32>
    %39 = arith.addf %37, %38 : vector<1x128xf32>
    %cst_27 = arith.constant 7.812500e-03 : f32
    %40 = vector.broadcast %cst_27 : f32 to vector<1x128xf32>
    %41 = arith.mulf %39, %40 : vector<1x128xf32>
    %cst_28 = arith.constant 9.99999974E-6 : f32
    %42 = vector.broadcast %cst_28 : f32 to vector<1x128xf32>
    %43 = arith.addf %41, %42 : vector<1x128xf32>
    %44 = math.rsqrt %43 : vector<1x128xf32>
    %45 = arith.mulf %17, %44 : vector<1x128xf32>
    %46 = vector.broadcast %45 : vector<1x128xf32> to vector<16x128xf32>
    %47 = arith.mulf %30, %46 : vector<16x128xf32>
    %48 = vector.broadcast %18 : vector<1x128xf32> to vector<16x128xf32>
    %49 = arith.addf %47, %48 : vector<16x128xf32>
    %cst_29 = arith.constant 0.000000e+00 : f32
    %50 = vector.broadcast %cst_29 : f32 to vector<16x128xf32>
    %51 = arith.maximumf %49, %50 : vector<16x128xf32>
    %52 = vector.extract_strided_slice %51 {offsets = [0, 0], sizes = [2, 128], strides = [1, 1]} : vector<16x128xf32> to vector<2x128xf32>
    %53 = vector.extract_strided_slice %51 {offsets = [4, 0], sizes = [2, 128], strides = [1, 1]} : vector<16x128xf32> to vector<2x128xf32>
    %54 = vector.extract_strided_slice %51 {offsets = [8, 0], sizes = [2, 128], strides = [1, 1]} : vector<16x128xf32> to vector<2x128xf32>
    %55 = vector.extract_strided_slice %51 {offsets = [12, 0], sizes = [2, 128], strides = [1, 1]} : vector<16x128xf32> to vector<2x128xf32>
    %56 = tpu.concatenate %52, %53, %54, %55 in 0 : vector<2x128xf32>, vector<2x128xf32>, vector<2x128xf32>, vector<2x128xf32> -> vector<8x128xf32>
    %57 = arith.truncf %56 : vector<8x128xf32> to vector<8x128xbf16>
    %58 = vector.extract_strided_slice %51 {offsets = [2, 0], sizes = [2, 128], strides = [1, 1]} : vector<16x128xf32> to vector<2x128xf32>
    %59 = vector.extract_strided_slice %51 {offsets = [6, 0], sizes = [2, 128], strides = [1, 1]} : vector<16x128xf32> to vector<2x128xf32>
    %60 = vector.extract_strided_slice %51 {offsets = [10, 0], sizes = [2, 128], strides = [1, 1]} : vector<16x128xf32> to vector<2x128xf32>
    %61 = vector.extract_strided_slice %51 {offsets = [14, 0], sizes = [2, 128], strides = [1, 1]} : vector<16x128xf32> to vector<2x128xf32>
    %62 = tpu.concatenate %58, %59, %60, %61 in 0 : vector<2x128xf32>, vector<2x128xf32>, vector<2x128xf32>, vector<2x128xf32> -> vector<8x128xf32>
    %63 = arith.truncf %62 : vector<8x128xf32> to vector<8x128xbf16>
    %cst_30 = arith.constant 0.000000e+00 : bf16
    %64 = vector.broadcast %cst_30 : bf16 to vector<2x128xbf16>
    %c1_31 = arith.constant 1 : index
    %c0_32 = arith.constant 0 : index
    %c0_33 = arith.constant 0 : index
    %65 = vector.load %arg8[%c1_31, %c0_32, %c0_33] : memref<2x10x128xbf16, #tpu.memory_space<vmem>>, vector<1x8x128xbf16>
    %66 = vector.shape_cast %65 : vector<1x8x128xbf16> to vector<8x128xbf16>
    %67 = vector.shape_cast %57 : vector<8x128xbf16> to vector<1x8x128xbf16>
    tpu.vector_store %arg8[%c1_31, %c0_32, %c0_33], %67 {strides = array<i32>} : memref<2x10x128xbf16, #tpu.memory_space<vmem>>, vector<1x8x128xbf16>,
    %c1_34 = arith.constant 1 : index
    %c8 = arith.constant 8 : index
    %c0_35 = arith.constant 0 : index
    %68 = vector.load %arg8[%c1_34, %c8, %c0_35] : memref<2x10x128xbf16, #tpu.memory_space<vmem>>, vector<1x2x128xbf16>
    %69 = vector.shape_cast %68 : vector<1x2x128xbf16> to vector<2x128xbf16>
    %70 = vector.shape_cast %64 : vector<2x128xbf16> to vector<1x2x128xbf16>
    tpu.vector_store %arg8[%c1_34, %c8, %c0_35], %70 {strides = array<i32>} : memref<2x10x128xbf16, #tpu.memory_space<vmem>>, vector<1x2x128xbf16>,
    %c0_36 = arith.constant 0 : index
    %c0_37 = arith.constant 0 : index
    %c0_38 = arith.constant 0 : index
    %71 = vector.load %arg8[%c0_36, %c0_37, %c0_38] : memref<2x10x128xbf16, #tpu.memory_space<vmem>>, vector<1x2x128xbf16>
    %72 = vector.shape_cast %71 : vector<1x2x128xbf16> to vector<2x128xbf16>
    %73 = vector.shape_cast %64 : vector<2x128xbf16> to vector<1x2x128xbf16>
    tpu.vector_store %arg8[%c0_36, %c0_37, %c0_38], %73 {strides = array<i32>} : memref<2x10x128xbf16, #tpu.memory_space<vmem>>, vector<1x2x128xbf16>,
    %c0_39 = arith.constant 0 : index
    %c2_40 = arith.constant 2 : index
    %c0_41 = arith.constant 0 : index
    %74 = vector.load %arg8[%c0_39, %c2_40, %c0_41] : memref<2x10x128xbf16, #tpu.memory_space<vmem>>, vector<1x8x128xbf16>
    %75 = vector.shape_cast %74 : vector<1x8x128xbf16> to vector<8x128xbf16>
    %76 = vector.shape_cast %63 : vector<8x128xbf16> to vector<1x8x128xbf16>
    tpu.vector_store %arg8[%c0_39, %c2_40, %c0_41], %76 {strides = array<i32>} : memref<2x10x128xbf16, #tpu.memory_space<vmem>>, vector<1x8x128xbf16>,
    %c0_42 = arith.constant 0 : index
    %c0_43 = arith.constant 0 : index
    %c0_44 = arith.constant 0 : index
    %77 = vector.load %arg8[%c0_42, %c0_43, %c0_44] : memref<2x10x128xbf16, #tpu.memory_space<vmem>>, vector<1x8x128xbf16>
    %78 = vector.shape_cast %77 : vector<1x8x128xbf16> to vector<8x128xbf16>
    %c0_45 = arith.constant 0 : index
    %c0_46 = arith.constant 0 : index
    %c0_47 = arith.constant 0 : index
    %79 = vector.load %arg2[%c0_45, %c0_46, %c0_47] : memref<3x128x128xbf16, #tpu.memory_space<vmem>>, vector<1x128x128xbf16>
    %80 = vector.shape_cast %79 : vector<1x128x128xbf16> to vector<128x128xbf16>
    %cst_48 = arith.constant dense<0.000000e+00> : vector<8x128xf32>
    %81 = tpu.matmul %78, %80, %cst_48 {dimension_numbers = #tpu.dot_dimension_numbers<[1], [0], [0], [1], [0, 0, 1, 1], [], []>} : vector<8x128xbf16>, vector<128x128xbf16>, vector<8x128xf32> -> vector<8x128xf32>
    %c1_49 = arith.constant 1 : index
    %c0_50 = arith.constant 0 : index
    %c0_51 = arith.constant 0 : index
    %82 = vector.load %arg8[%c1_49, %c0_50, %c0_51] : memref<2x10x128xbf16, #tpu.memory_space<vmem>>, vector<1x8x128xbf16>
    %83 = vector.shape_cast %82 : vector<1x8x128xbf16> to vector<8x128xbf16>
    %c1_52 = arith.constant 1 : index
    %c0_53 = arith.constant 0 : index
    %c0_54 = arith.constant 0 : index
    %84 = vector.load %arg2[%c1_52, %c0_53, %c0_54] : memref<3x128x128xbf16, #tpu.memory_space<vmem>>, vector<1x128x128xbf16>
    %85 = vector.shape_cast %84 : vector<1x128x128xbf16> to vector<128x128xbf16>
    %cst_55 = arith.constant dense<0.000000e+00> : vector<8x128xf32>
    %86 = tpu.matmul %83, %85, %cst_55 {dimension_numbers = #tpu.dot_dimension_numbers<[1], [0], [0], [1], [0, 0, 1, 1], [], []>} : vector<8x128xbf16>, vector<128x128xbf16>, vector<8x128xf32> -> vector<8x128xf32>
    %87 = arith.addf %81, %86 : vector<8x128xf32>
    %c0_56 = arith.constant 0 : index
    %c2_57 = arith.constant 2 : index
    %c0_58 = arith.constant 0 : index
    %88 = vector.load %arg8[%c0_56, %c2_57, %c0_58] : memref<2x10x128xbf16, #tpu.memory_space<vmem>>, vector<1x8x128xbf16>
    %89 = vector.shape_cast %88 : vector<1x8x128xbf16> to vector<8x128xbf16>
    %c2_59 = arith.constant 2 : index
    %c0_60 = arith.constant 0 : index
    %c0_61 = arith.constant 0 : index
    %90 = vector.load %arg2[%c2_59, %c0_60, %c0_61] : memref<3x128x128xbf16, #tpu.memory_space<vmem>>, vector<1x128x128xbf16>
    %91 = vector.shape_cast %90 : vector<1x128x128xbf16> to vector<128x128xbf16>
    %cst_62 = arith.constant dense<0.000000e+00> : vector<8x128xf32>
    %92 = tpu.matmul %89, %91, %cst_62 {dimension_numbers = #tpu.dot_dimension_numbers<[1], [0], [0], [1], [0, 0, 1, 1], [], []>} : vector<8x128xbf16>, vector<128x128xbf16>, vector<8x128xf32> -> vector<8x128xf32>
    %93 = arith.addf %87, %92 : vector<8x128xf32>
    %c2_63 = arith.constant 2 : index
    %c0_64 = arith.constant 0 : index
    %94 = vector.load %arg4[%c2_63, %c0_64] : memref<6x128xf32, #tpu.memory_space<vmem>>, vector<1x128xf32>
    %c3 = arith.constant 3 : index
    %c0_65 = arith.constant 0 : index
    %95 = vector.load %arg4[%c3, %c0_65] : memref<6x128xf32, #tpu.memory_space<vmem>>, vector<1x128xf32>
    %cst_66 = arith.constant dense<0.000000e+00> : vector<128xf32>
    %96 = vector.multi_reduction <add>, %93, %cst_66 [0] : vector<8x128xf32> to vector<128xf32>
    %97 = vector.shape_cast %96 : vector<128xf32> to vector<1x128xf32>
    %c32_i32_67 = arith.constant 32 : i32
    %98 = tpu.dynamic_rotate %97 by %c32_i32_67 dim 1 : vector<1x128xf32>, i32 -> vector<1x128xf32>
    %99 = arith.addf %97, %98 : vector<1x128xf32>
    %c64_i32_68 = arith.constant 64 : i32
    %100 = tpu.dynamic_rotate %99 by %c64_i32_68 dim 1 : vector<1x128xf32>, i32 -> vector<1x128xf32>
    %101 = arith.addf %99, %100 : vector<1x128xf32>
    %cst_69 = arith.constant 3.125000e-02 : f32
    %102 = vector.broadcast %cst_69 : f32 to vector<1x128xf32>
    %103 = arith.mulf %101, %102 : vector<1x128xf32>
    %104 = vector.broadcast %103 : vector<1x128xf32> to vector<8x128xf32>
    %105 = arith.subf %93, %104 : vector<8x128xf32>
    %106 = arith.mulf %105, %105 : vector<8x128xf32>
    %cst_70 = arith.constant dense<0.000000e+00> : vector<128xf32>
    %107 = vector.multi_reduction <add>, %106, %cst_70 [0] : vector<8x128xf32> to vector<128xf32>
    %108 = vector.shape_cast %107 : vector<128xf32> to vector<1x128xf32>
    %c32_i32_71 = arith.constant 32 : i32
    %109 = tpu.dynamic_rotate %108 by %c32_i32_71 dim 1 : vector<1x128xf32>, i32 -> vector<1x128xf32>
    %110 = arith.addf %108, %109 : vector<1x128xf32>
    %c64_i32_72 = arith.constant 64 : i32
    %111 = tpu.dynamic_rotate %110 by %c64_i32_72 dim 1 : vector<1x128xf32>, i32 -> vector<1x128xf32>
    %112 = arith.addf %110, %111 : vector<1x128xf32>
    %cst_73 = arith.constant 3.125000e-02 : f32
    %113 = vector.broadcast %cst_73 : f32 to vector<1x128xf32>
    %114 = arith.mulf %112, %113 : vector<1x128xf32>
    %cst_74 = arith.constant 9.99999974E-6 : f32
    %115 = vector.broadcast %cst_74 : f32 to vector<1x128xf32>
    %116 = arith.addf %114, %115 : vector<1x128xf32>
    %117 = math.rsqrt %116 : vector<1x128xf32>
    %118 = arith.mulf %94, %117 : vector<1x128xf32>
    %119 = vector.broadcast %118 : vector<1x128xf32> to vector<8x128xf32>
    %120 = arith.mulf %105, %119 : vector<8x128xf32>
    %121 = vector.broadcast %95 : vector<1x128xf32> to vector<8x128xf32>
    %122 = arith.addf %120, %121 : vector<8x128xf32>
    %cst_75 = arith.constant 0.000000e+00 : f32
    %123 = vector.broadcast %cst_75 : f32 to vector<8x128xf32>
    %124 = arith.maximumf %122, %123 : vector<8x128xf32>
    %125 = vector.extract_strided_slice %124 {offsets = [0, 0], sizes = [2, 128], strides = [1, 1]} : vector<8x128xf32> to vector<2x128xf32>
    %126 = vector.extract_strided_slice %124 {offsets = [4, 0], sizes = [2, 128], strides = [1, 1]} : vector<8x128xf32> to vector<2x128xf32>
    %127 = tpu.concatenate %125, %126 in 0 : vector<2x128xf32>, vector<2x128xf32> -> vector<4x128xf32>
    %128 = arith.truncf %127 : vector<4x128xf32> to vector<4x128xbf16>
    %129 = vector.extract_strided_slice %124 {offsets = [2, 0], sizes = [2, 128], strides = [1, 1]} : vector<8x128xf32> to vector<2x128xf32>
    %130 = vector.extract_strided_slice %124 {offsets = [6, 0], sizes = [2, 128], strides = [1, 1]} : vector<8x128xf32> to vector<2x128xf32>
    %131 = tpu.concatenate %129, %130 in 0 : vector<2x128xf32>, vector<2x128xf32> -> vector<4x128xf32>
    %132 = arith.truncf %131 : vector<4x128xf32> to vector<4x128xbf16>
    %cst_76 = arith.constant 0.000000e+00 : bf16
    %133 = vector.broadcast %cst_76 : bf16 to vector<2x128xbf16>
    %c1_77 = arith.constant 1 : index
    %c0_78 = arith.constant 0 : index
    %c0_79 = arith.constant 0 : index
    %134 = vector.load %arg9[%c1_77, %c0_78, %c0_79] : memref<2x6x128xbf16, #tpu.memory_space<vmem>>, vector<1x4x128xbf16>
    %135 = vector.shape_cast %134 : vector<1x4x128xbf16> to vector<4x128xbf16>
    %136 = vector.shape_cast %128 : vector<4x128xbf16> to vector<1x4x128xbf16>
    tpu.vector_store %arg9[%c1_77, %c0_78, %c0_79], %136 {strides = array<i32>} : memref<2x6x128xbf16, #tpu.memory_space<vmem>>, vector<1x4x128xbf16>,
    %c1_80 = arith.constant 1 : index
    %c4 = arith.constant 4 : index
    %c0_81 = arith.constant 0 : index
    %137 = vector.load %arg9[%c1_80, %c4, %c0_81] : memref<2x6x128xbf16, #tpu.memory_space<vmem>>, vector<1x2x128xbf16>
    %138 = vector.shape_cast %137 : vector<1x2x128xbf16> to vector<2x128xbf16>
    %139 = vector.shape_cast %133 : vector<2x128xbf16> to vector<1x2x128xbf16>
    tpu.vector_store %arg9[%c1_80, %c4, %c0_81], %139 {strides = array<i32>} : memref<2x6x128xbf16, #tpu.memory_space<vmem>>, vector<1x2x128xbf16>,
    %c0_82 = arith.constant 0 : index
    %c0_83 = arith.constant 0 : index
    %c0_84 = arith.constant 0 : index
    %140 = vector.load %arg9[%c0_82, %c0_83, %c0_84] : memref<2x6x128xbf16, #tpu.memory_space<vmem>>, vector<1x2x128xbf16>
    %141 = vector.shape_cast %140 : vector<1x2x128xbf16> to vector<2x128xbf16>
    %142 = vector.shape_cast %133 : vector<2x128xbf16> to vector<1x2x128xbf16>
    tpu.vector_store %arg9[%c0_82, %c0_83, %c0_84], %142 {strides = array<i32>} : memref<2x6x128xbf16, #tpu.memory_space<vmem>>, vector<1x2x128xbf16>,
    %c0_85 = arith.constant 0 : index
    %c2_86 = arith.constant 2 : index
    %c0_87 = arith.constant 0 : index
    %143 = vector.load %arg9[%c0_85, %c2_86, %c0_87] : memref<2x6x128xbf16, #tpu.memory_space<vmem>>, vector<1x4x128xbf16>
    %144 = vector.shape_cast %143 : vector<1x4x128xbf16> to vector<4x128xbf16>
    %145 = vector.shape_cast %132 : vector<4x128xbf16> to vector<1x4x128xbf16>
    tpu.vector_store %arg9[%c0_85, %c2_86, %c0_87], %145 {strides = array<i32>} : memref<2x6x128xbf16, #tpu.memory_space<vmem>>, vector<1x4x128xbf16>,
    %c0_88 = arith.constant 0 : index
    %c0_89 = arith.constant 0 : index
    %c0_90 = arith.constant 0 : index
    %146 = vector.load %arg9[%c0_88, %c0_89, %c0_90] : memref<2x6x128xbf16, #tpu.memory_space<vmem>>, vector<1x4x128xbf16>
    %147 = vector.shape_cast %146 : vector<1x4x128xbf16> to vector<4x128xbf16>
    %c0_91 = arith.constant 0 : index
    %c0_92 = arith.constant 0 : index
    %c0_93 = arith.constant 0 : index
    %148 = vector.load %arg3[%c0_91, %c0_92, %c0_93] : memref<3x128x128xbf16, #tpu.memory_space<vmem>>, vector<1x128x128xbf16>
    %149 = vector.shape_cast %148 : vector<1x128x128xbf16> to vector<128x128xbf16>
    %cst_94 = arith.constant dense<0.000000e+00> : vector<4x128xf32>
    %150 = tpu.matmul %147, %149, %cst_94 {dimension_numbers = #tpu.dot_dimension_numbers<[1], [0], [0], [1], [0, 0, 1, 1], [], []>} : vector<4x128xbf16>, vector<128x128xbf16>, vector<4x128xf32> -> vector<4x128xf32>
    %c1_95 = arith.constant 1 : index
    %c0_96 = arith.constant 0 : index
    %c0_97 = arith.constant 0 : index
    %151 = vector.load %arg9[%c1_95, %c0_96, %c0_97] : memref<2x6x128xbf16, #tpu.memory_space<vmem>>, vector<1x4x128xbf16>
    %152 = vector.shape_cast %151 : vector<1x4x128xbf16> to vector<4x128xbf16>
    %c1_98 = arith.constant 1 : index
    %c0_99 = arith.constant 0 : index
    %c0_100 = arith.constant 0 : index
    %153 = vector.load %arg3[%c1_98, %c0_99, %c0_100] : memref<3x128x128xbf16, #tpu.memory_space<vmem>>, vector<1x128x128xbf16>
    %154 = vector.shape_cast %153 : vector<1x128x128xbf16> to vector<128x128xbf16>
    %cst_101 = arith.constant dense<0.000000e+00> : vector<4x128xf32>
    %155 = tpu.matmul %152, %154, %cst_101 {dimension_numbers = #tpu.dot_dimension_numbers<[1], [0], [0], [1], [0, 0, 1, 1], [], []>} : vector<4x128xbf16>, vector<128x128xbf16>, vector<4x128xf32> -> vector<4x128xf32>
    %156 = arith.addf %150, %155 : vector<4x128xf32>
    %c0_102 = arith.constant 0 : index
    %c2_103 = arith.constant 2 : index
    %c0_104 = arith.constant 0 : index
    %157 = vector.load %arg9[%c0_102, %c2_103, %c0_104] : memref<2x6x128xbf16, #tpu.memory_space<vmem>>, vector<1x4x128xbf16>
    %158 = vector.shape_cast %157 : vector<1x4x128xbf16> to vector<4x128xbf16>
    %c2_105 = arith.constant 2 : index
    %c0_106 = arith.constant 0 : index
    %c0_107 = arith.constant 0 : index
    %159 = vector.load %arg3[%c2_105, %c0_106, %c0_107] : memref<3x128x128xbf16, #tpu.memory_space<vmem>>, vector<1x128x128xbf16>
    %160 = vector.shape_cast %159 : vector<1x128x128xbf16> to vector<128x128xbf16>
    %cst_108 = arith.constant dense<0.000000e+00> : vector<4x128xf32>
    %161 = tpu.matmul %158, %160, %cst_108 {dimension_numbers = #tpu.dot_dimension_numbers<[1], [0], [0], [1], [0, 0, 1, 1], [], []>} : vector<4x128xbf16>, vector<128x128xbf16>, vector<4x128xf32> -> vector<4x128xf32>
    %162 = arith.addf %156, %161 : vector<4x128xf32>
    %c4_109 = arith.constant 4 : index
    %c0_110 = arith.constant 0 : index
    %163 = vector.load %arg4[%c4_109, %c0_110] : memref<6x128xf32, #tpu.memory_space<vmem>>, vector<1x128xf32>
    %c5 = arith.constant 5 : index
    %c0_111 = arith.constant 0 : index
    %164 = vector.load %arg4[%c5, %c0_111] : memref<6x128xf32, #tpu.memory_space<vmem>>, vector<1x128xf32>
    %cst_112 = arith.constant dense<0.000000e+00> : vector<128xf32>
    %165 = vector.multi_reduction <add>, %162, %cst_112 [0] : vector<4x128xf32> to vector<128xf32>
    %166 = vector.shape_cast %165 : vector<128xf32> to vector<1x128xf32>
    %c64_i32_113 = arith.constant 64 : i32
    %167 = tpu.dynamic_rotate %166 by %c64_i32_113 dim 1 : vector<1x128xf32>, i32 -> vector<1x128xf32>
    %168 = arith.addf %166, %167 : vector<1x128xf32>
    %cst_114 = arith.constant 1.250000e-01 : f32
    %169 = vector.broadcast %cst_114 : f32 to vector<1x128xf32>
    %170 = arith.mulf %168, %169 : vector<1x128xf32>
    %171 = vector.broadcast %170 : vector<1x128xf32> to vector<4x128xf32>
    %172 = arith.subf %162, %171 : vector<4x128xf32>
    %173 = arith.mulf %172, %172 : vector<4x128xf32>
    %cst_115 = arith.constant dense<0.000000e+00> : vector<128xf32>
    %174 = vector.multi_reduction <add>, %173, %cst_115 [0] : vector<4x128xf32> to vector<128xf32>
    %175 = vector.shape_cast %174 : vector<128xf32> to vector<1x128xf32>
    %c64_i32_116 = arith.constant 64 : i32
    %176 = tpu.dynamic_rotate %175 by %c64_i32_116 dim 1 : vector<1x128xf32>, i32 -> vector<1x128xf32>
    %177 = arith.addf %175, %176 : vector<1x128xf32>
    %cst_117 = arith.constant 1.250000e-01 : f32
    %178 = vector.broadcast %cst_117 : f32 to vector<1x128xf32>
    %179 = arith.mulf %177, %178 : vector<1x128xf32>
    %cst_118 = arith.constant 9.99999974E-6 : f32
    %180 = vector.broadcast %cst_118 : f32 to vector<1x128xf32>
    %181 = arith.addf %179, %180 : vector<1x128xf32>
    %182 = math.rsqrt %181 : vector<1x128xf32>
    %183 = arith.mulf %163, %182 : vector<1x128xf32>
    %184 = vector.broadcast %183 : vector<1x128xf32> to vector<4x128xf32>
    %185 = arith.mulf %172, %184 : vector<4x128xf32>
    %186 = vector.broadcast %164 : vector<1x128xf32> to vector<4x128xf32>
    %187 = arith.addf %185, %186 : vector<4x128xf32>
    %cst_119 = arith.constant 0.000000e+00 : f32
    %188 = vector.broadcast %cst_119 : f32 to vector<4x128xf32>
    %189 = arith.maximumf %187, %188 : vector<4x128xf32>
    %190 = vector.extract_strided_slice %189 {offsets = [0, 0], sizes = [2, 128], strides = [1, 1]} : vector<4x128xf32> to vector<2x128xf32>
    %191 = vector.extract_strided_slice %189 {offsets = [2, 0], sizes = [2, 128], strides = [1, 1]} : vector<4x128xf32> to vector<2x128xf32>
    %192 = arith.addf %190, %191 : vector<2x128xf32>
    %193 = arith.truncf %192 : vector<2x128xf32> to vector<2x128xbf16>
    %c0_120 = arith.constant 0 : index
    %c0_121 = arith.constant 0 : index
    %194 = vector.load %arg5[%c0_120, %c0_121] : memref<128x768xbf16, #tpu.memory_space<vmem>>, vector<128x768xbf16>
    %cst_122 = arith.constant dense<0.000000e+00> : vector<2x768xf32>
    %195 = tpu.matmul %193, %194, %cst_122 {dimension_numbers = #tpu.dot_dimension_numbers<[1], [0], [0], [1], [0, 0, 1, 1], [], []>} : vector<2x128xbf16>, vector<128x768xbf16>, vector<2x768xf32> -> vector<2x768xf32>
    %c0_123 = arith.constant 0 : index
    %c0_124 = arith.constant 0 : index
    %196 = vector.load %arg6[%c0_123, %c0_124] : memref<1x768xf32, #tpu.memory_space<vmem>>, vector<1x768xf32>
    %197 = vector.broadcast %196 : vector<1x768xf32> to vector<2x768xf32>
    %198 = arith.addf %195, %197 : vector<2x768xf32>
    %c0_125 = arith.constant 0 : index
    %c0_126 = arith.constant 0 : index
    %199 = vector.load %arg7[%c0_125, %c0_126] : memref<2x768xf32, #tpu.memory_space<vmem>>, vector<2x768xf32>
    tpu.vector_store %arg7[%c0_125, %c0_126], %198 {strides = array<i32>} : memref<2x768xf32, #tpu.memory_space<vmem>>, vector<2x768xf32>,
    return
  }
}

</mosaic_0001>

<llo_original>
// kernel: tile.33
$region0: #{tile.33}
  #allocation0 [shape = 's32[1]{0}', space=sflag, size = 0x4, scoped, tag = 'scoped memory for tile.33']
  %s0 = inlined_call_operand.vmem [shape: f32[16], index: 0, kind: input, shape index: {}]
  %s1 = inlined_call_operand.vmem [shape: f32[8,16], index: 1, kind: output, shape index: {}]
  // Predicated region
  $region2: #{tile.33} parent=0 // pred_check
    _
  $region3: #{tile.33} parent=0 // pred_check_branch
    %3 = sbr.rel (0) target = $region5
  $region4: #{tile.33} parent=0 // pred_region
    _
  $region5: #{tile.33} parent=0 // pred_fallthru
    _
  %v4 = vld [vmem:[%s0] ss:$0 sm:$0xff]
  %5 = vst [vmem:[%s1] sm:$0xff] %v4

// kernel: tile.54
$region0: #{tile.54}
  %s0 = inlined_call_operand.vmem [shape: f32[8,16], index: 0, kind: input, shape index: {}]
  %s1 = inlined_call_operand.vmem [shape: f32[1,128], index: 1, kind: output, shape index: {}]
  $region1: #{tile.54} parent=0
    #allocation0 [shape = 'u8[4096]{0}', space=vmem, size = 0x1000, scoped, tag = 'scoped mem for output reshape']
    %v2 = vld [vmem:[%s0] sm:$0x1]
    %vm3 = vcmask 130048
    %4 = vst.msk [vmem:[#allocation0] sm:$0x1] %vm3, %v2
    %s5 = scalar_lea.vmem %s0, 7
    %v6 = vld [vmem:[%s5] sm:$0x1]
    %7 = vrot.lane.b32.xlu0 %v6, 112
    %v8 = vpop.permute.xlu0 %7
    %vm9 = vcmask 1048448
    %10 = vst.msk [vmem:[#allocation0] sm:$0x1] %vm9, %v8
    %s11 = scalar_lea.vmem %s0, 6
    %v12 = vld [vmem:[%s11] sm:$0x1]
    %13 = vrot.lane.b32.xlu0 %v12, 96
    %v14 = vpop.permute.xlu0 %13
    %vm15 = vcmask 917248
    %16 = vst.msk [vmem:[#allocation0] sm:$0x1] %vm15, %v14
    %s17 = scalar_lea.vmem %s0, 5
    %v18 = vld [vmem:[%s17] sm:$0x1]
    %19 = vrot.lane.b32.xlu0 %v18, 80
    %v20 = vpop.permute.xlu0 %19
    %vm21 = vcmask 786048
    %22 = vst.msk [vmem:[#allocation0] sm:$0x1] %vm21, %v20
    %s23 = scalar_lea.vmem %s0, 4
    %v24 = vld [vmem:[%s23] sm:$0x1]
    %25 = vrot.lane.b32.xlu0 %v24, 64
    %v26 = vpop.permute.xlu0 %25
    %vm27 = vcmask 654848
    %28 = vst.msk [vmem:[#allocation0] sm:$0x1] %vm27, %v26
    %s29 = scalar_lea.vmem %s0, 3
    %v30 = vld [vmem:[%s29] sm:$0x1]
    %31 = vrot.lane.b32.xlu0 %v30, 48
    %v32 = vpop.permute.xlu0 %31
    %vm33 = vcmask 523648
    %34 = vst.msk [vmem:[#allocation0] sm:$0x1] %vm33, %v32
    %s35 = scalar_lea.vmem %s0, 2
    %v36 = vld [vmem:[%s35] sm:$0x1]
    %37 = vrot.lane.b32.xlu0 %v36, 32
    %v38 = vpop.permute.xlu0 %37
    %vm39 = vcmask 392448
    %40 = vst.msk [vmem:[#allocation0] sm:$0x1] %vm39, %v38
    %s41 = scalar_lea.vmem %s0, 1
    %v42 = vld [vmem:[%s41] sm:$0x1]
    %43 = vrot.lane.b32.xlu0 %v42, 16
    %v44 = vpop.permute.xlu0 %43
    %vm45 = vcmask 261248
    %46 = vst.msk [vmem:[#allocation0] sm:$0x1] %vm45, %v44
    %s48 = ssub.s32 2, 1
    %v49 = vld [vmem:[#allocation0] sm:%s48]
    %s51 = ssub.s32 2, 1
    %52 = vst [vmem:[%s1] sm:%s51] %v49

// kernel: tile.41
$region0: #{tile.41}
  #allocation0 [shape = 's32[1]{0}', space=sflag, size = 0x4, scoped, tag = 'scoped memory for tile.41']
  %s0 = inlined_call_operand.vmem [shape: f32[32], index: 0, kind: input, shape index: {}]
  %s1 = inlined_call_operand.vmem [shape: f32[4,32], index: 1, kind: output, shape index: {}]
  // Predicated region
  $region2: #{tile.41} parent=0 // pred_check
    _
  $region3: #{tile.41} parent=0 // pred_check_branch
    %3 = sbr.rel (0) target = $region5
  $region4: #{tile.41} parent=0 // pred_region
    _
  $region5: #{tile.41} parent=0 // pred_fallthru
    _
  %v4 = vld [vmem:[%s0] ss:$0 sm:$0xff]
  %5 = vst [vmem:[%s1] sm:$0xf] %v4

// kernel: tile.56
$region0: #{tile.56}
  %s0 = inlined_call_operand.vmem [shape: f32[4,32], index: 0, kind: input, shape index: {}]
  %s1 = inlined_call_operand.vmem [shape: f32[1,128], index: 1, kind: output, shape index: {}]
  $region1: #{tile.56} parent=0
    #allocation0 [shape = 'u8[4096]{0}', space=vmem, size = 0x1000, scoped, tag = 'scoped mem for output reshape']
    #allocation1 [shape = 'u8[4096]{0}', space=vmem, size = 0x1000, scoped, tag = 'scoped mem for input reshape']
    %s3 = ssub.s32 16, 1
    %v4 = vld [vmem:[%s0] sm:%s3]
    %5 = vst [vmem:[#allocation1] sm:%s3] %v4
    %v6 = vld [vmem:[#allocation1] sm:$0x1]
    %vm7 = vcmask 261120
    %8 = vst.msk [vmem:[#allocation0] sm:$0x1] %vm7, %v6
    %s9 = scalar_lea.vmem [#allocation1], 3
    %v10 = vld [vmem:[%s9] sm:$0x1]
    %11 = vrot.lane.b32.xlu0 %v10, 96
    %v12 = vpop.permute.xlu0 %11
    %vm13 = vcmask 1048320
    %14 = vst.msk [vmem:[#allocation0] sm:$0x1] %vm13, %v12
    %s15 = scalar_lea.vmem [#allocation1], 2
    %v16 = vld [vmem:[%s15] sm:$0x1]
    %17 = vrot.lane.b32.xlu0 %v16, 64
    %v18 = vpop.permute.xlu0 %17
    %vm19 = vcmask 785920
    %20 = vst.msk [vmem:[#allocation0] sm:$0x1] %vm19, %v18
    %s21 = scalar_lea.vmem [#allocation1], 1
    %v22 = vld [vmem:[%s21] sm:$0x1]
    %23 = vrot.lane.b32.xlu0 %v22, 32
    %v24 = vpop.permute.xlu0 %23
    %vm25 = vcmask 523520
    %26 = vst.msk [vmem:[#allocation0] sm:$0x1] %vm25, %v24
    %s28 = ssub.s32 2, 1
    %v29 = vld [vmem:[#allocation0] sm:%s28]
    %s31 = ssub.s32 2, 1
    %32 = vst [vmem:[%s1] sm:%s31] %v29

// kernel: tile.49
$region0: #{tile.49}
  #allocation0 [shape = 's32[1]{0}', space=sflag, size = 0x4, scoped, tag = 'scoped memory for tile.49']
  %s0 = inlined_call_operand.vmem [shape: f32[64], index: 0, kind: input, shape index: {}]
  %s1 = inlined_call_operand.vmem [shape: f32[2,64], index: 1, kind: output, shape index: {}]
  // Predicated region
  $region2: #{tile.49} parent=0 // pred_check
    _
  $region3: #{tile.49} parent=0 // pred_check_branch
    %3 = sbr.rel (0) target = $region5
  $region4: #{tile.49} parent=0 // pred_region
    _
  $region5: #{tile.49} parent=0 // pred_fallthru
    _
  %v4 = vld [vmem:[%s0] ss:$0 sm:$0xff]
  %5 = vst [vmem:[%s1] sm:$0x3] %v4

// kernel: tile.58
$region0: #{tile.58}
  %s0 = inlined_call_operand.vmem [shape: f32[2,64], index: 0, kind: input, shape index: {}]
  %s1 = inlined_call_operand.vmem [shape: f32[1,128], index: 1, kind: output, shape index: {}]
  $region1: #{tile.58} parent=0
    #allocation0 [shape = 'u8[4096]{0}', space=vmem, size = 0x1000, scoped, tag = 'scoped mem for output reshape']
    #allocation1 [shape = 'u8[4096]{0}', space=vmem, size = 0x1000, scoped, tag = 'scoped mem for input reshape']
    %s3 = ssub.s32 4, 1
    %v4 = vld [vmem:[%s0] sm:%s3]
    %5 = vst [vmem:[#allocation1] sm:%s3] %v4
    %v6 = vld [vmem:[#allocation1] sm:$0x1]
    %vm7 = vcmask 523264
    %8 = vst.msk [vmem:[#allocation0] sm:$0x1] %vm7, %v6
    %s9 = scalar_lea.vmem [#allocation1], 1
    %v10 = vld [vmem:[%s9] sm:$0x1]
    %11 = vrot.lane.b32.xlu0 %v10, 64
    %v12 = vpop.permute.xlu0 %11
    %vm13 = vcmask 1048064
    %14 = vst.msk [vmem:[#allocation0] sm:$0x1] %vm13, %v12
    %s16 = ssub.s32 2, 1
    %v17 = vld [vmem:[#allocation0] sm:%s16]
    %s19 = ssub.s32 2, 1
    %20 = vst [vmem:[%s1] sm:%s19] %v17

// kernel: simple_cnn_forward.1
$region0: #{simple_cnn_forward.1}
  #allocation0 [shape = 'u32[]', space=smem, size = 0x4, offset = 0x4, fixed_abs, tag = 'smem constant byte address 0x4 - core index']
  #allocation1 [shape = 'u32[72,128]{1,0:T(1,128)}', space=vmem, size = 0x9000, scoped, tag = 'internal scratch']
  #allocation2 [shape = 'bf16[2,10,128]{2,1,0:T(8,128)(2,1)}', space=vmem, size = 0x2000, scoped, tag = 'scratch operand']
  #allocation3 [shape = 'bf16[2,6,128]{2,1,0:T(8,128)(2,1)}', space=vmem, size = 0x1000, scoped, tag = 'scratch operand']
  %s0 = inlined_call_operand.vmem [shape: bf16[2,18,48], index: 0, kind: input, shape index: {}]
  %s1 = inlined_call_operand.vmem [shape: bf16[3,48,128], index: 1, kind: input, shape index: {}]
  %s2 = inlined_call_operand.vmem [shape: bf16[3,128,128], index: 2, kind: input, shape index: {}]
  %s3 = inlined_call_operand.vmem [shape: bf16[3,128,128], index: 3, kind: input, shape index: {}]
  %s4 = inlined_call_operand.vmem [shape: f32[6,128], index: 4, kind: input, shape index: {}]
  %s5 = inlined_call_operand.vmem [shape: bf16[128,768], index: 5, kind: input, shape index: {}]
  %s6 = inlined_call_operand.vmem [shape: f32[1,768], index: 6, kind: input, shape index: {}]
  %s7 = inlined_call_operand.hbm [shape: f32[2,768], index: 7, kind: output, shape index: {}]
  %s8 = sld [smem:[#allocation0]]
  $region38: #{simple_cnn_forward.1} parent=0
    _
  %s10 = ssub.s32 1, %s8
  %s11 = scalar_select 0, %s10, %s8
  $region1: #{simple_cnn_forward.1} parent=0
    #allocation4 [shape = 'u8[6144]{0}', space=vmem, size = 0x1800, scoped, tag = 'output window, operand 0, single buffered']
    #allocation5 [shape = 's32[1]{0}', space=sflag, size = 0x4, scoped, tag = 'scoped memory for simple_cnn_forward.1']
    %12 = vsyncpa [#allocation5], 0
    // Predicated region
    $region2: #{simple_cnn_forward.1} parent=1 // pred_check
      _
    $region3: #{simple_cnn_forward.1} parent=1 // pred_check_branch
      %14 = sbr.rel (0) target = $region5
    $region4: #{simple_cnn_forward.1} parent=1 // pred_region
      _
    $region5: #{simple_cnn_forward.1} parent=1 // pred_fallthru
      _
    // Predicated region
    $region6: #{simple_cnn_forward.1} parent=1 // pred_check
      _
    $region7: #{simple_cnn_forward.1} parent=1 // pred_check_branch
      %16 = sbr.rel (0) target = $region9
    $region8: #{simple_cnn_forward.1} parent=1 // pred_region
      _
    $region9: #{simple_cnn_forward.1} parent=1 // pred_fallthru
      _
    // Predicated region
    $region10: #{simple_cnn_forward.1} parent=1 // pred_check
      _
    $region11: #{simple_cnn_forward.1} parent=1 // pred_check_branch
      %18 = sbr.rel (0) target = $region13
    $region12: #{simple_cnn_forward.1} parent=1 // pred_region
      _
    $region13: #{simple_cnn_forward.1} parent=1 // pred_fallthru
      _
    // Predicated region
    $region14: #{simple_cnn_forward.1} parent=1 // pred_check
      _
    $region15: #{simple_cnn_forward.1} parent=1 // pred_check_branch
      %20 = sbr.rel (0) target = $region17
    $region16: #{simple_cnn_forward.1} parent=1 // pred_region
      _
    $region17: #{simple_cnn_forward.1} parent=1 // pred_fallthru
      _
    // Predicated region
    $region18: #{simple_cnn_forward.1} parent=1 // pred_check
      _
    $region19: #{simple_cnn_forward.1} parent=1 // pred_check_branch
      %22 = sbr.rel (0) target = $region21
    $region20: #{simple_cnn_forward.1} parent=1 // pred_region
      _
    $region21: #{simple_cnn_forward.1} parent=1 // pred_fallthru
      _
    // Predicated region
    $region22: #{simple_cnn_forward.1} parent=1 // pred_check
      _
    $region23: #{simple_cnn_forward.1} parent=1 // pred_check_branch
      %24 = sbr.rel (0) target = $region25
    $region24: #{simple_cnn_forward.1} parent=1 // pred_region
      _
    $region25: #{simple_cnn_forward.1} parent=1 // pred_fallthru
      _
    // Predicated region
    $region26: #{simple_cnn_forward.1} parent=1 // pred_check
      _
    $region27: #{simple_cnn_forward.1} parent=1 // pred_check_branch
      %26 = sbr.rel (0) target = $region29
    $region28: #{simple_cnn_forward.1} parent=1 // pred_region
      _
    $region29: #{simple_cnn_forward.1} parent=1 // pred_fallthru
      _
    %v28 = vld [vmem:[%s0] sm:$0xf]
    %v29 = vld [vmem:[%s0 + $0x4] sm:$0xf]
    %v30 = vld [vmem:[%s1] sm:$0xf]
    %v31 = vld [vmem:[%s1 + $0x4] sm:$0xf]
    %v32 = vld [vmem:[%s1 + $0x8] sm:$0xf]
    %v33 = vld [vmem:[%s1 + $0xc] sm:$0xf]
    %v34 = vld [vmem:[%s1 + $0x10] sm:$0xf]
    %v35 = vld [vmem:[%s1 + $0x14] sm:$0xf]
    %s36 = scalar_lea.vmem %s0, 12
    %v37 = vld [vmem:[%s36] sm:$0xf]
    %v38 = vld [vmem:[%s36 + $0x4] sm:$0xf]
    %s39 = scalar_lea.vmem %s1, 24
    %v40 = vld [vmem:[%s39] sm:$0xf]
    %v41 = vld [vmem:[%s39 + $0x4] sm:$0xf]
    %v42 = vld [vmem:[%s39 + $0x8] sm:$0xf]
    %v43 = vld [vmem:[%s39 + $0xc] sm:$0xf]
    %v44 = vld [vmem:[%s39 + $0x10] sm:$0xf]
    %v45 = vld [vmem:[%s39 + $0x14] sm:$0xf]
    %v48 = vunpack.c.l.b16 %v37
    %v49 = vunpack.c.l.b16 %v38
    %v50 = vpack.c.b16 %v49, %v48
    %v57 = vunpack.c.l.b16 %v40
    %v58 = vunpack.c.l.b16 %v41
    %v59 = vunpack.c.l.b16 %v42
    %v60 = vunpack.c.l.b16 %v43
    %v61 = vunpack.c.l.b16 %v44
    %v62 = vunpack.c.l.b16 %v45
    %v63 = vpack.c.b16 %v58, %v57
    %v64 = vpack.c.b16 %v60, %v59
    %v65 = vpack.c.b16 %v62, %v61
    %vm69 = vcmask 392192
    %v71 = vsel %vm69, %v50, 0
    %73 = vmatpush.bf16.msra.mxu0 0
    %74 = vmatpush.bf16.msra.mxu0 0
    %75 = vmatpush.bf16.msra.mxu0 0
    %76 = vmatpush.bf16.msra.mxu0 0
    %77 = vmatpush.bf16.msra.mxu0 0
    %78 = vmatpush.bf16.msra.mxu0 %v65
    %79 = vmatpush.bf16.msra.mxu0 %v64
    %80 = vmatpush.bf16.msra.mxu0 %v63
    %81 = vmatmul.bf16.gmra.mxu0 %v71
    %v82 = vpop.f32.mrf.mxu0
    %v83 = vadd.f32 0.0, %v82
    %v84 = vpop.f32.mrf.mxu0
    %v85 = vadd.f32 0.0, %v84
    %86 = vdwg.mxu0
    %v89 = vunpack.c.l.b16 %v28
    %v90 = vunpack.c.l.b16 %v29
    %v91 = vpack.c.b16 %v90, %v89
    %v98 = vunpack.c.l.b16 %v30
    %v99 = vunpack.c.l.b16 %v31
    %v100 = vunpack.c.l.b16 %v32
    %v101 = vunpack.c.l.b16 %v33
    %v102 = vunpack.c.l.b16 %v34
    %v103 = vunpack.c.l.b16 %v35
    %v104 = vpack.c.b16 %v99, %v98
    %v105 = vpack.c.b16 %v101, %v100
    %v106 = vpack.c.b16 %v103, %v102
    %v111 = vsel %vm69, %v91, 0
    %113 = vmatpush.bf16.msra.mxu0 0
    %114 = vmatpush.bf16.msra.mxu0 0
    %115 = vmatpush.bf16.msra.mxu0 0
    %116 = vmatpush.bf16.msra.mxu0 0
    %117 = vmatpush.bf16.msra.mxu0 0
    %118 = vmatpush.bf16.msra.mxu0 %v106
    %119 = vmatpush.bf16.msra.mxu0 %v105
    %120 = vmatpush.bf16.msra.mxu0 %v104
    %121 = vmatmul.bf16.gmra.mxu0 %v111
    %v122 = vpop.f32.mrf.mxu0
    %v123 = vadd.f32 %v83, %v122
    %v124 = vpop.f32.mrf.mxu0
    %v125 = vadd.f32 %v85, %v124
    %126 = vdwg.mxu0
    %v127 = vld [vmem:[%s0] sm:$0xe]
    %v128 = vld [vmem:[%s0 + $0x4] sm:$0xf]
    %v129 = vld [vmem:[%s0 + $0x8] sm:$0x1]
    %s130 = scalar_lea.vmem %s1, 48
    %v131 = vld [vmem:[%s130] sm:$0xf]
    %v132 = vld [vmem:[%s130 + $0x4] sm:$0xf]
    %v133 = vld [vmem:[%s130 + $0x8] sm:$0xf]
    %v134 = vld [vmem:[%s130 + $0xc] sm:$0xf]
    %v135 = vld [vmem:[%s130 + $0x10] sm:$0xf]
    %v136 = vld [vmem:[%s130 + $0x14] sm:$0xf]
    %v140 = vunpack.c.l.b16 %v127
    %v141 = vunpack.c.l.b16 %v128
    %v142 = vunpack.c.l.b16 %v129
    %v143 = vpack.c.b16 %v141, %v140
    %v144 = vpack.c.b16 %v142, %v142
    %vm145 = vcmask 1046528
    %v146 = vrot.slane %v143, 1
    %v147 = vrot.slane %v144, 1
    %v148 = vsel %vm145, %v146, %v147
    %v155 = vunpack.c.l.b16 %v131
    %v156 = vunpack.c.l.b16 %v132
    %v157 = vunpack.c.l.b16 %v133
    %v158 = vunpack.c.l.b16 %v134
    %v159 = vunpack.c.l.b16 %v135
    %v160 = vunpack.c.l.b16 %v136
    %v161 = vpack.c.b16 %v156, %v155
    %v162 = vpack.c.b16 %v158, %v157
    %v163 = vpack.c.b16 %v160, %v159
    %v168 = vsel %vm69, %v148, 0
    %170 = vmatpush.bf16.msra.mxu0 0
    %171 = vmatpush.bf16.msra.mxu0 0
    %172 = vmatpush.bf16.msra.mxu0 0
    %173 = vmatpush.bf16.msra.mxu0 0
    %174 = vmatpush.bf16.msra.mxu0 0
    %175 = vmatpush.bf16.msra.mxu0 %v163
    %176 = vmatpush.bf16.msra.mxu0 %v162
    %177 = vmatpush.bf16.msra.mxu0 %v161
    %178 = vmatmul.bf16.gmra.mxu0 %v168
    %v179 = vpop.f32.mrf.mxu0
    %v180 = vadd.f32 0.0, %v179
    %v181 = vpop.f32.mrf.mxu0
    %v182 = vadd.f32 0.0, %v181
    %183 = vdwg.mxu0
    %v184 = vadd.f32 %v123, %v180
    %v185 = vadd.f32 %v125, %v182
    %v186 = vld [vmem:[%s4] sm:$0x1]
    %v187 = vld [vmem:[%s4 + $0x1] sm:$0x1]
    %v188 = vadd.f32 %v184, %v185
    %v189 = vrot.slane %v188, 4
    %v190 = vadd.f32 %v188, %v189
    %v191 = vrot.slane %v190, 2
    %v192 = vadd.f32 %v190, %v191
    %v193 = vrot.slane %v192, 1
    %v194 = vadd.f32 %v192, %v193
    %195 = vrot.lane.b32.xlu0 %v194, 16
    %v196 = vpop.permute.xlu0 %195
    %v197 = vadd.f32 %v194, %v196
    %198 = vrot.lane.b32.xlu0 %v197, 32
    %v199 = vpop.permute.xlu0 %198
    %v200 = vadd.f32 %v197, %v199
    %201 = vrot.lane.b32.xlu0 %v200, 64
    %v202 = vpop.permute.xlu0 %201
    %v203 = vadd.f32 %v200, %v202
    %v204 = vmul.f32 %v203, 0.0078125
    %v205 = vperm.slane %v204, 0
    %v206 = vsub.f32 %v184, %v205
    %v207 = vsub.f32 %v185, %v205
    %v208 = vmul.f32 %v206, %v206
    %v209 = vmul.f32 %v207, %v207
    %v210 = vadd.f32 %v208, %v209
    %v211 = vrot.slane %v210, 4
    %v212 = vadd.f32 %v210, %v211
    %v213 = vrot.slane %v212, 2
    %v214 = vadd.f32 %v212, %v213
    %v215 = vrot.slane %v214, 1
    %v216 = vadd.f32 %v214, %v215
    %217 = vrot.lane.b32.xlu0 %v216, 16
    %v218 = vpop.permute.xlu0 %217
    %v219 = vadd.f32 %v216, %v218
    %220 = vrot.lane.b32.xlu0 %v219, 32
    %v221 = vpop.permute.xlu0 %220
    %v222 = vadd.f32 %v219, %v221
    %223 = vrot.lane.b32.xlu0 %v222, 64
    %v224 = vpop.permute.xlu0 %223
    %v225 = vadd.f32 %v222, %v224
    %v226 = vmul.f32 %v225, 0.0078125
    %v227 = vadd.f32 %v226, 1e-05
    %v228 = vrsqrt.pop %v227
    %v229 = vmul.f32 %v228, %v227
    %v230 = vmul.f32 %v229, %v228
    %v231 = vmul.f32 0.5, %v230
    %v232 = vsub.f32 1.5, %v231
    %v233 = vmul.f32 %v228, %v232
    %vm234 = vweird.f32 %v227
    %vm235 = vweird.f32 %v228
    %vm236 = vmor %vm234, %vm235
    %v237 = vsel %vm236, %v228, %v233
    %v238 = vmul.f32 %v186, %v237
    %v239 = vperm.slane %v238, 0
    %v240 = vmul.f32 %v206, %v239
    %v241 = vmul.f32 %v207, %v239
    %v242 = vperm.slane %v187, 0
    %v243 = vadd.f32 %v240, %v242
    %v244 = vadd.f32 %v241, %v242
    %v245 = vmax.f32 %v243, 0.0
    %v246 = vmax.f32 %v244, 0.0
    %v248 = vrot.slane %v245, 2
    %v251 = vrot.slane %v246, 4
    %v253 = vrot.slane %v246, 6
    %vm255 = vcmask 1041408
    %v256 = vsel %vm255, %v245, %v248
    %vm257 = vcmask 1043456
    %v258 = vsel %vm257, %v256, %v251
    %vm259 = vcmask 1045504
    %v260 = vsel %vm259, %v258, %v253
    %v261 = vpack.c.bf16 %v260, %v260
    %v262 = vrot.slane %v245, 4
    %v264 = vsel %vm255, %v248, %v262
    %v265 = vsel %vm257, %v264, %v253
    %v266 = vsel %vm259, %v265, %v246
    %v267 = vpack.c.bf16 %v266, %v266
    %s268 = scalar_lea.vmem [#allocation2], 8
    %269 = vst [vmem:[%s268] sm:$0xf] %v261
    %270 = vst [vmem:[%s268 + $0x4] sm:$0x1] 0
    %271 = vst [vmem:[#allocation2] sm:$0x1] 0
    %v273 = vrot.slane %v267, 7
    %v274 = vrot.slane %v273, 4
    %277 = vst [vmem:[#allocation2] sm:$0xe] %v273
    %278 = vst [vmem:[#allocation2 + $0x4] sm:$0x1] %v274
    %v279 = vld [vmem:[#allocation2] sm:$0xf]
    %v280 = vld [vmem:[%s2] sm:$0xf]
    %v281 = vld [vmem:[%s2 + $0x4] sm:$0xf]
    %v282 = vld [vmem:[%s2 + $0x8] sm:$0xf]
    %v283 = vld [vmem:[%s2 + $0xc] sm:$0xf]
    %v284 = vld [vmem:[%s2 + $0x10] sm:$0xf]
    %v285 = vld [vmem:[%s2 + $0x14] sm:$0xf]
    %v286 = vld [vmem:[%s2 + $0x18] sm:$0xf]
    %v287 = vld [vmem:[%s2 + $0x1c] sm:$0xf]
    %v288 = vld [vmem:[%s2 + $0x20] sm:$0xf]
    %v289 = vld [vmem:[%s2 + $0x24] sm:$0xf]
    %v290 = vld [vmem:[%s2 + $0x28] sm:$0xf]
    %v291 = vld [vmem:[%s2 + $0x2c] sm:$0xf]
    %v292 = vld [vmem:[%s2 + $0x30] sm:$0xf]
    %v293 = vld [vmem:[%s2 + $0x34] sm:$0xf]
    %v294 = vld [vmem:[%s2 + $0x38] sm:$0xf]
    %v295 = vld [vmem:[%s2 + $0x3c] sm:$0xf]
    %v296 = vld [vmem:[%s268] sm:$0xf]
    %s297 = scalar_lea.vmem %s2, 64
    %v298 = vld [vmem:[%s297] sm:$0xf]
    %v299 = vld [vmem:[%s297 + $0x4] sm:$0xf]
    %v300 = vld [vmem:[%s297 + $0x8] sm:$0xf]
    %v301 = vld [vmem:[%s297 + $0xc] sm:$0xf]
    %v302 = vld [vmem:[%s297 + $0x10] sm:$0xf]
    %v303 = vld [vmem:[%s297 + $0x14] sm:$0xf]
    %v304 = vld [vmem:[%s297 + $0x18] sm:$0xf]
    %v305 = vld [vmem:[%s297 + $0x1c] sm:$0xf]
    %v306 = vld [vmem:[%s297 + $0x20] sm:$0xf]
    %v307 = vld [vmem:[%s297 + $0x24] sm:$0xf]
    %v308 = vld [vmem:[%s297 + $0x28] sm:$0xf]
    %v309 = vld [vmem:[%s297 + $0x2c] sm:$0xf]
    %v310 = vld [vmem:[%s297 + $0x30] sm:$0xf]
    %v311 = vld [vmem:[%s297 + $0x34] sm:$0xf]
    %v312 = vld [vmem:[%s297 + $0x38] sm:$0xf]
    %v313 = vld [vmem:[%s297 + $0x3c] sm:$0xf]
    %v330 = vunpack.c.l.b16 %v298
    %v331 = vunpack.c.l.b16 %v299
    %v332 = vunpack.c.l.b16 %v300
    %v333 = vunpack.c.l.b16 %v301
    %v334 = vunpack.c.l.b16 %v302
    %v335 = vunpack.c.l.b16 %v303
    %v336 = vunpack.c.l.b16 %v304
    %v337 = vunpack.c.l.b16 %v305
    %v338 = vunpack.c.l.b16 %v306
    %v339 = vunpack.c.l.b16 %v307
    %v340 = vunpack.c.l.b16 %v308
    %v341 = vunpack.c.l.b16 %v309
    %v342 = vunpack.c.l.b16 %v310
    %v343 = vunpack.c.l.b16 %v311
    %v344 = vunpack.c.l.b16 %v312
    %v345 = vunpack.c.l.b16 %v313
    %v346 = vpack.c.b16 %v331, %v330
    %v347 = vpack.c.b16 %v333, %v332
    %v348 = vpack.c.b16 %v335, %v334
    %v349 = vpack.c.b16 %v337, %v336
    %v350 = vpack.c.b16 %v339, %v338
    %v351 = vpack.c.b16 %v341, %v340
    %v352 = vpack.c.b16 %v343, %v342
    %v353 = vpack.c.b16 %v345, %v344
    %362 = vmatpush.bf16.msra.mxu0 %v353
    %363 = vmatpush.bf16.msra.mxu0 %v352
    %364 = vmatpush.bf16.msra.mxu0 %v351
    %365 = vmatpush.bf16.msra.mxu0 %v350
    %366 = vmatpush.bf16.msra.mxu0 %v349
    %367 = vmatpush.bf16.msra.mxu0 %v348
    %368 = vmatpush.bf16.msra.mxu0 %v347
    %369 = vmatpush.bf16.msra.mxu0 %v346
    %370 = vmatmul.bf16.gmra.mxu0 %v296
    %v371 = vpop.f32.mrf.mxu0
    %v372 = vadd.f32 0.0, %v371
    %v373 = vpop.f32.mrf.mxu0
    %374 = vdwg.mxu0
    %v391 = vunpack.c.l.b16 %v280
    %v392 = vunpack.c.l.b16 %v281
    %v393 = vunpack.c.l.b16 %v282
    %v394 = vunpack.c.l.b16 %v283
    %v395 = vunpack.c.l.b16 %v284
    %v396 = vunpack.c.l.b16 %v285
    %v397 = vunpack.c.l.b16 %v286
    %v398 = vunpack.c.l.b16 %v287
    %v399 = vunpack.c.l.b16 %v288
    %v400 = vunpack.c.l.b16 %v289
    %v401 = vunpack.c.l.b16 %v290
    %v402 = vunpack.c.l.b16 %v291
    %v403 = vunpack.c.l.b16 %v292
    %v404 = vunpack.c.l.b16 %v293
    %v405 = vunpack.c.l.b16 %v294
    %v406 = vunpack.c.l.b16 %v295
    %v407 = vpack.c.b16 %v392, %v391
    %v408 = vpack.c.b16 %v394, %v393
    %v409 = vpack.c.b16 %v396, %v395
    %v410 = vpack.c.b16 %v398, %v397
    %v411 = vpack.c.b16 %v400, %v399
    %v412 = vpack.c.b16 %v402, %v401
    %v413 = vpack.c.b16 %v404, %v403
    %v414 = vpack.c.b16 %v406, %v405
    %423 = vmatpush.bf16.msra.mxu0 %v414
    %424 = vmatpush.bf16.msra.mxu0 %v413
    %425 = vmatpush.bf16.msra.mxu0 %v412
    %426 = vmatpush.bf16.msra.mxu0 %v411
    %427 = vmatpush.bf16.msra.mxu0 %v410
    %428 = vmatpush.bf16.msra.mxu0 %v409
    %429 = vmatpush.bf16.msra.mxu0 %v408
    %430 = vmatpush.bf16.msra.mxu0 %v407
    %431 = vmatmul.bf16.gmra.mxu0 %v279
    %v432 = vpop.f32.mrf.mxu0
    %v433 = vadd.f32 %v372, %v432
    %v434 = vpop.f32.mrf.mxu0
    %435 = vdwg.mxu0
    %v436 = vld [vmem:[#allocation2] sm:$0xe]
    %v437 = vld [vmem:[#allocation2 + $0x4] sm:$0x1]
    %s438 = scalar_lea.vmem %s2, 128
    %v439 = vld [vmem:[%s438] sm:$0xf]
    %v440 = vld [vmem:[%s438 + $0x4] sm:$0xf]
    %v441 = vld [vmem:[%s438 + $0x8] sm:$0xf]
    %v442 = vld [vmem:[%s438 + $0xc] sm:$0xf]
    %v443 = vld [vmem:[%s438 + $0x10] sm:$0xf]
    %v444 = vld [vmem:[%s438 + $0x14] sm:$0xf]
    %v445 = vld [vmem:[%s438 + $0x18] sm:$0xf]
    %v446 = vld [vmem:[%s438 + $0x1c] sm:$0xf]
    %v447 = vld [vmem:[%s438 + $0x20] sm:$0xf]
    %v448 = vld [vmem:[%s438 + $0x24] sm:$0xf]
    %v449 = vld [vmem:[%s438 + $0x28] sm:$0xf]
    %v450 = vld [vmem:[%s438 + $0x2c] sm:$0xf]
    %v451 = vld [vmem:[%s438 + $0x30] sm:$0xf]
    %v452 = vld [vmem:[%s438 + $0x34] sm:$0xf]
    %v453 = vld [vmem:[%s438 + $0x38] sm:$0xf]
    %v454 = vld [vmem:[%s438 + $0x3c] sm:$0xf]
    %v457 = vunpack.c.l.b16 %v436
    %v458 = vunpack.c.l.b16 %v437
    %v459 = vpack.c.b16 %v458, %v457
    %v460 = vrot.slane %v459, 1
    %v478 = vunpack.c.l.b16 %v439
    %v479 = vunpack.c.l.b16 %v440
    %v480 = vunpack.c.l.b16 %v441
    %v481 = vunpack.c.l.b16 %v442
    %v482 = vunpack.c.l.b16 %v443
    %v483 = vunpack.c.l.b16 %v444
    %v484 = vunpack.c.l.b16 %v445
    %v485 = vunpack.c.l.b16 %v446
    %v486 = vunpack.c.l.b16 %v447
    %v487 = vunpack.c.l.b16 %v448
    %v488 = vunpack.c.l.b16 %v449
    %v489 = vunpack.c.l.b16 %v450
    %v490 = vunpack.c.l.b16 %v451
    %v491 = vunpack.c.l.b16 %v452
    %v492 = vunpack.c.l.b16 %v453
    %v493 = vunpack.c.l.b16 %v454
    %v494 = vpack.c.b16 %v479, %v478
    %v495 = vpack.c.b16 %v481, %v480
    %v496 = vpack.c.b16 %v483, %v482
    %v497 = vpack.c.b16 %v485, %v484
    %v498 = vpack.c.b16 %v487, %v486
    %v499 = vpack.c.b16 %v489, %v488
    %v500 = vpack.c.b16 %v491, %v490
    %v501 = vpack.c.b16 %v493, %v492
    %510 = vmatpush.bf16.msra.mxu0 %v501
    %511 = vmatpush.bf16.msra.mxu0 %v500
    %512 = vmatpush.bf16.msra.mxu0 %v499
    %513 = vmatpush.bf16.msra.mxu0 %v498
    %514 = vmatpush.bf16.msra.mxu0 %v497
    %515 = vmatpush.bf16.msra.mxu0 %v496
    %516 = vmatpush.bf16.msra.mxu0 %v495
    %517 = vmatpush.bf16.msra.mxu0 %v494
    %518 = vmatmul.bf16.gmra.mxu0 %v460
    %v519 = vpop.f32.mrf.mxu0
    %v520 = vadd.f32 0.0, %v519
    %v521 = vpop.f32.mrf.mxu0
    %522 = vdwg.mxu0
    %v523 = vadd.f32 %v433, %v520
    %v524 = vld [vmem:[%s4 + $0x2] sm:$0x1]
    %v525 = vld [vmem:[%s4 + $0x3] sm:$0x1]
    %v526 = vrot.slane %v523, 4
    %v527 = vadd.f32 %v523, %v526
    %v528 = vrot.slane %v527, 2
    %v529 = vadd.f32 %v527, %v528
    %v530 = vrot.slane %v529, 1
    %v531 = vadd.f32 %v529, %v530
    %532 = vrot.lane.b32.xlu0 %v531, 32
    %v533 = vpop.permute.xlu0 %532
    %v534 = vadd.f32 %v531, %v533
    %535 = vrot.lane.b32.xlu0 %v534, 64
    %v536 = vpop.permute.xlu0 %535
    %v537 = vadd.f32 %v534, %v536
    %v538 = vmul.f32 %v537, 0.03125
    %v539 = vperm.slane %v538, 0
    %v540 = vsub.f32 %v523, %v539
    %v541 = vmul.f32 %v540, %v540
    %v542 = vrot.slane %v541, 4
    %v543 = vadd.f32 %v541, %v542
    %v544 = vrot.slane %v543, 2
    %v545 = vadd.f32 %v543, %v544
    %v546 = vrot.slane %v545, 1
    %v547 = vadd.f32 %v545, %v546
    %548 = vrot.lane.b32.xlu0 %v547, 32
    %v549 = vpop.permute.xlu0 %548
    %v550 = vadd.f32 %v547, %v549
    %551 = vrot.lane.b32.xlu0 %v550, 64
    %v552 = vpop.permute.xlu0 %551
    %v553 = vadd.f32 %v550, %v552
    %v554 = vmul.f32 %v553, 0.03125
    %v555 = vadd.f32 %v554, 1e-05
    %v556 = vrsqrt.pop %v555
    %v557 = vmul.f32 %v556, %v555
    %v558 = vmul.f32 %v557, %v556
    %v559 = vmul.f32 0.5, %v558
    %v560 = vsub.f32 1.5, %v559
    %v561 = vmul.f32 %v556, %v560
    %vm562 = vweird.f32 %v555
    %vm563 = vweird.f32 %v556
    %vm564 = vmor %vm562, %vm563
    %v565 = vsel %vm564, %v556, %v561
    %v566 = vmul.f32 %v524, %v565
    %v567 = vperm.slane %v566, 0
    %v568 = vmul.f32 %v540, %v567
    %v569 = vperm.slane %v525, 0
    %v570 = vadd.f32 %v568, %v569
    %v571 = vmax.f32 %v570, 0.0
    %v573 = vrot.slane %v571, 2
    %v575 = vsel %vm255, %v571, %v573
    %v576 = vpack.c.bf16 %v575, %v575
    %v577 = vrot.slane %v571, 4
    %v579 = vsel %vm255, %v573, %v577
    %v580 = vpack.c.bf16 %v579, %v579
    %s581 = scalar_lea.vmem [#allocation3], 4
    %582 = vst [vmem:[%s581] sm:$0x3] %v576
    %583 = vst [vmem:[%s581] sm:$0x4] 0
    %584 = vst [vmem:[#allocation3] sm:$0x1] 0
    %v586 = vrot.slane %v580, 7
    %588 = vst [vmem:[#allocation3] sm:$0x6] %v586
    %v589 = vld [vmem:[#allocation3] sm:$0x3]
    %v590 = vld [vmem:[%s3] sm:$0xf]
    %v591 = vld [vmem:[%s3 + $0x4] sm:$0xf]
    %v592 = vld [vmem:[%s3 + $0x8] sm:$0xf]
    %v593 = vld [vmem:[%s3 + $0xc] sm:$0xf]
    %v594 = vld [vmem:[%s3 + $0x10] sm:$0xf]
    %v595 = vld [vmem:[%s3 + $0x14] sm:$0xf]
    %v596 = vld [vmem:[%s3 + $0x18] sm:$0xf]
    %v597 = vld [vmem:[%s3 + $0x1c] sm:$0xf]
    %v598 = vld [vmem:[%s3 + $0x20] sm:$0xf]
    %v599 = vld [vmem:[%s3 + $0x24] sm:$0xf]
    %v600 = vld [vmem:[%s3 + $0x28] sm:$0xf]
    %v601 = vld [vmem:[%s3 + $0x2c] sm:$0xf]
    %v602 = vld [vmem:[%s3 + $0x30] sm:$0xf]
    %v603 = vld [vmem:[%s3 + $0x34] sm:$0xf]
    %v604 = vld [vmem:[%s3 + $0x38] sm:$0xf]
    %v605 = vld [vmem:[%s3 + $0x3c] sm:$0xf]
    %v606 = vld [vmem:[%s581] sm:$0x3]
    %s607 = scalar_lea.vmem %s3, 64
    %v608 = vld [vmem:[%s607] sm:$0xf]
    %v609 = vld [vmem:[%s607 + $0x4] sm:$0xf]
    %v610 = vld [vmem:[%s607 + $0x8] sm:$0xf]
    %v611 = vld [vmem:[%s607 + $0xc] sm:$0xf]
    %v612 = vld [vmem:[%s607 + $0x10] sm:$0xf]
    %v613 = vld [vmem:[%s607 + $0x14] sm:$0xf]
    %v614 = vld [vmem:[%s607 + $0x18] sm:$0xf]
    %v615 = vld [vmem:[%s607 + $0x1c] sm:$0xf]
    %v616 = vld [vmem:[%s607 + $0x20] sm:$0xf]
    %v617 = vld [vmem:[%s607 + $0x24] sm:$0xf]
    %v618 = vld [vmem:[%s607 + $0x28] sm:$0xf]
    %v619 = vld [vmem:[%s607 + $0x2c] sm:$0xf]
    %v620 = vld [vmem:[%s607 + $0x30] sm:$0xf]
    %v621 = vld [vmem:[%s607 + $0x34] sm:$0xf]
    %v622 = vld [vmem:[%s607 + $0x38] sm:$0xf]
    %v623 = vld [vmem:[%s607 + $0x3c] sm:$0xf]
    %v640 = vunpack.c.l.b16 %v608
    %v641 = vunpack.c.l.b16 %v609
    %v642 = vunpack.c.l.b16 %v610
    %v643 = vunpack.c.l.b16 %v611
    %v644 = vunpack.c.l.b16 %v612
    %v645 = vunpack.c.l.b16 %v613
    %v646 = vunpack.c.l.b16 %v614
    %v647 = vunpack.c.l.b16 %v615
    %v648 = vunpack.c.l.b16 %v616
    %v649 = vunpack.c.l.b16 %v617
    %v650 = vunpack.c.l.b16 %v618
    %v651 = vunpack.c.l.b16 %v619
    %v652 = vunpack.c.l.b16 %v620
    %v653 = vunpack.c.l.b16 %v621
    %v654 = vunpack.c.l.b16 %v622
    %v655 = vunpack.c.l.b16 %v623
    %v656 = vpack.c.b16 %v641, %v640
    %v657 = vpack.c.b16 %v643, %v642
    %v658 = vpack.c.b16 %v645, %v644
    %v659 = vpack.c.b16 %v647, %v646
    %v660 = vpack.c.b16 %v649, %v648
    %v661 = vpack.c.b16 %v651, %v650
    %v662 = vpack.c.b16 %v653, %v652
    %v663 = vpack.c.b16 %v655, %v654
    %672 = vmatpush.bf16.msra.mxu0 %v663
    %673 = vmatpush.bf16.msra.mxu0 %v662
    %674 = vmatpush.bf16.msra.mxu0 %v661
    %675 = vmatpush.bf16.msra.mxu0 %v660
    %676 = vmatpush.bf16.msra.mxu0 %v659
    %677 = vmatpush.bf16.msra.mxu0 %v658
    %678 = vmatpush.bf16.msra.mxu0 %v657
    %679 = vmatpush.bf16.msra.mxu0 %v656
    %680 = vmatmul.bf16.gmra.mxu0 %v606
    %v681 = vpop.f32.mrf.mxu0
    %v682 = vadd.f32 0.0, %v681
    %v683 = vpop.f32.mrf.mxu0
    %684 = vdwg.mxu0
    %v701 = vunpack.c.l.b16 %v590
    %v702 = vunpack.c.l.b16 %v591
    %v703 = vunpack.c.l.b16 %v592
    %v704 = vunpack.c.l.b16 %v593
    %v705 = vunpack.c.l.b16 %v594
    %v706 = vunpack.c.l.b16 %v595
    %v707 = vunpack.c.l.b16 %v596
    %v708 = vunpack.c.l.b16 %v597
    %v709 = vunpack.c.l.b16 %v598
    %v710 = vunpack.c.l.b16 %v599
    %v711 = vunpack.c.l.b16 %v600
    %v712 = vunpack.c.l.b16 %v601
    %v713 = vunpack.c.l.b16 %v602
    %v714 = vunpack.c.l.b16 %v603
    %v715 = vunpack.c.l.b16 %v604
    %v716 = vunpack.c.l.b16 %v605
    %v717 = vpack.c.b16 %v702, %v701
    %v718 = vpack.c.b16 %v704, %v703
    %v719 = vpack.c.b16 %v706, %v705
    %v720 = vpack.c.b16 %v708, %v707
    %v721 = vpack.c.b16 %v710, %v709
    %v722 = vpack.c.b16 %v712, %v711
    %v723 = vpack.c.b16 %v714, %v713
    %v724 = vpack.c.b16 %v716, %v715
    %733 = vmatpush.bf16.msra.mxu0 %v724
    %734 = vmatpush.bf16.msra.mxu0 %v723
    %735 = vmatpush.bf16.msra.mxu0 %v722
    %736 = vmatpush.bf16.msra.mxu0 %v721
    %737 = vmatpush.bf16.msra.mxu0 %v720
    %738 = vmatpush.bf16.msra.mxu0 %v719
    %739 = vmatpush.bf16.msra.mxu0 %v718
    %740 = vmatpush.bf16.msra.mxu0 %v717
    %741 = vmatmul.bf16.gmra.mxu0 %v589
    %v742 = vpop.f32.mrf.mxu0
    %v743 = vadd.f32 %v682, %v742
    %v744 = vpop.f32.mrf.mxu0
    %745 = vdwg.mxu0
    %v746 = vld [vmem:[#allocation3] sm:$0x6]
    %s747 = scalar_lea.vmem %s3, 128
    %v748 = vld [vmem:[%s747] sm:$0xf]
    %v749 = vld [vmem:[%s747 + $0x4] sm:$0xf]
    %v750 = vld [vmem:[%s747 + $0x8] sm:$0xf]
    %v751 = vld [vmem:[%s747 + $0xc] sm:$0xf]
    %v752 = vld [vmem:[%s747 + $0x10] sm:$0xf]
    %v753 = vld [vmem:[%s747 + $0x14] sm:$0xf]
    %v754 = vld [vmem:[%s747 + $0x18] sm:$0xf]
    %v755 = vld [vmem:[%s747 + $0x1c] sm:$0xf]
    %v756 = vld [vmem:[%s747 + $0x20] sm:$0xf]
    %v757 = vld [vmem:[%s747 + $0x24] sm:$0xf]
    %v758 = vld [vmem:[%s747 + $0x28] sm:$0xf]
    %v759 = vld [vmem:[%s747 + $0x2c] sm:$0xf]
    %v760 = vld [vmem:[%s747 + $0x30] sm:$0xf]
    %v761 = vld [vmem:[%s747 + $0x34] sm:$0xf]
    %v762 = vld [vmem:[%s747 + $0x38] sm:$0xf]
    %v763 = vld [vmem:[%s747 + $0x3c] sm:$0xf]
    %v765 = vunpack.c.l.b16 %v746
    %v766 = vpack.c.b16 %v765, %v765
    %v767 = vrot.slane %v766, 1
    %v785 = vunpack.c.l.b16 %v748
    %v786 = vunpack.c.l.b16 %v749
    %v787 = vunpack.c.l.b16 %v750
    %v788 = vunpack.c.l.b16 %v751
    %v789 = vunpack.c.l.b16 %v752
    %v790 = vunpack.c.l.b16 %v753
    %v791 = vunpack.c.l.b16 %v754
    %v792 = vunpack.c.l.b16 %v755
    %v793 = vunpack.c.l.b16 %v756
    %v794 = vunpack.c.l.b16 %v757
    %v795 = vunpack.c.l.b16 %v758
    %v796 = vunpack.c.l.b16 %v759
    %v797 = vunpack.c.l.b16 %v760
    %v798 = vunpack.c.l.b16 %v761
    %v799 = vunpack.c.l.b16 %v762
    %v800 = vunpack.c.l.b16 %v763
    %v801 = vpack.c.b16 %v786, %v785
    %v802 = vpack.c.b16 %v788, %v787
    %v803 = vpack.c.b16 %v790, %v789
    %v804 = vpack.c.b16 %v792, %v791
    %v805 = vpack.c.b16 %v794, %v793
    %v806 = vpack.c.b16 %v796, %v795
    %v807 = vpack.c.b16 %v798, %v797
    %v808 = vpack.c.b16 %v800, %v799
    %817 = vmatpush.bf16.msra.mxu0 %v808
    %818 = vmatpush.bf16.msra.mxu0 %v807
    %819 = vmatpush.bf16.msra.mxu0 %v806
    %820 = vmatpush.bf16.msra.mxu0 %v805
    %821 = vmatpush.bf16.msra.mxu0 %v804
    %822 = vmatpush.bf16.msra.mxu0 %v803
    %823 = vmatpush.bf16.msra.mxu0 %v802
    %824 = vmatpush.bf16.msra.mxu0 %v801
    %825 = vmatmul.bf16.gmra.mxu0 %v767
    %v826 = vpop.f32.mrf.mxu0
    %v827 = vadd.f32 0.0, %v826
    %v828 = vpop.f32.mrf.mxu0
    %829 = vdwg.mxu0
    %v830 = vadd.f32 %v743, %v827
    %v831 = vld [vmem:[%s4 + $0x4] sm:$0x1]
    %v832 = vld [vmem:[%s4 + $0x5] sm:$0x1]
    %v833 = vsel %vm257, %v830, 0.0
    %v834 = vrot.slane %v833, 4
    %v835 = vadd.f32 %v833, %v834
    %v836 = vrot.slane %v835, 2
    %v837 = vadd.f32 %v835, %v836
    %v838 = vrot.slane %v837, 1
    %v839 = vadd.f32 %v837, %v838
    %840 = vrot.lane.b32.xlu0 %v839, 64
    %v841 = vpop.permute.xlu0 %840
    %v842 = vadd.f32 %v839, %v841
    %v843 = vmul.f32 %v842, 0.125
    %v844 = vperm.slane %v843, 0
    %v845 = vsub.f32 %v830, %v844
    %v846 = vmul.f32 %v845, %v845
    %v847 = vsel %vm257, %v846, 0.0
    %v848 = vrot.slane %v847, 4
    %v849 = vadd.f32 %v847, %v848
    %v850 = vrot.slane %v849, 2
    %v851 = vadd.f32 %v849, %v850
    %v852 = vrot.slane %v851, 1
    %v853 = vadd.f32 %v851, %v852
    %854 = vrot.lane.b32.xlu0 %v853, 64
    %v855 = vpop.permute.xlu0 %854
    %v856 = vadd.f32 %v853, %v855
    %v857 = vmul.f32 %v856, 0.125
    %v858 = vadd.f32 %v857, 1e-05
    %v859 = vrsqrt.pop %v858
    %v860 = vmul.f32 %v859, %v858
    %v861 = vmul.f32 %v860, %v859
    %v862 = vmul.f32 0.5, %v861
    %v863 = vsub.f32 1.5, %v862
    %v864 = vmul.f32 %v859, %v863
    %vm865 = vweird.f32 %v858
    %vm866 = vweird.f32 %v859
    %vm867 = vmor %vm865, %vm866
    %v868 = vsel %vm867, %v859, %v864
    %v869 = vmul.f32 %v831, %v868
    %v870 = vperm.slane %v869, 0
    %v871 = vmul.f32 %v845, %v870
    %v872 = vperm.slane %v832, 0
    %v873 = vadd.f32 %v871, %v872
    %v874 = vmax.f32 %v873, 0.0
    %v876 = vrot.slane %v874, 2
    %v878 = vadd.f32 %v874, %v876
    %v879 = vpack.c.bf16 %v878, %v878
    %v880 = vld [vmem:[%s5] sm:$0xff]
    %v881 = vld [vmem:[%s5 + $0x8] sm:$0xff]
    %v882 = vld [vmem:[%s5 + $0x10] sm:$0xff]
    %v883 = vld [vmem:[%s5 + $0x18] sm:$0xff]
    %v884 = vld [vmem:[%s5 + $0x20] sm:$0xff]
    %v885 = vld [vmem:[%s5 + $0x28] sm:$0xff]
    %v886 = vld [vmem:[%s5 + $0x30] sm:$0xff]
    %v887 = vld [vmem:[%s5 + $0x38] sm:$0xff]
    %v888 = vld [vmem:[%s5 + $0x40] sm:$0xff]
    %v889 = vld [vmem:[%s5 + $0x48] sm:$0xff]
    %v890 = vld [vmem:[%s5 + $0x50] sm:$0xff]
    %v891 = vld [vmem:[%s5 + $0x58] sm:$0xff]
    %v892 = vld [vmem:[%s5 + $0x60] sm:$0xff]
    %v893 = vld [vmem:[%s5 + $0x68] sm:$0xff]
    %v894 = vld [vmem:[%s5 + $0x70] sm:$0xff]
    %v895 = vld [vmem:[%s5 + $0x78] sm:$0xff]
    %v896 = vld [vmem:[%s5 + $0x80] sm:$0xff]
    %v897 = vld [vmem:[%s5 + $0x88] sm:$0xff]
    %v898 = vld [vmem:[%s5 + $0x90] sm:$0xff]
    %v899 = vld [vmem:[%s5 + $0x98] sm:$0xff]
    %v900 = vld [vmem:[%s5 + $0xa0] sm:$0xff]
    %v901 = vld [vmem:[%s5 + $0xa8] sm:$0xff]
    %v902 = vld [vmem:[%s5 + $0xb0] sm:$0xff]
    %v903 = vld [vmem:[%s5 + $0xb8] sm:$0xff]
    %v904 = vld [vmem:[%s5 + $0xc0] sm:$0xff]
    %v905 = vld [vmem:[%s5 + $0xc8] sm:$0xff]
    %v906 = vld [vmem:[%s5 + $0xd0] sm:$0xff]
    %v907 = vld [vmem:[%s5 + $0xd8] sm:$0xff]
    %v908 = vld [vmem:[%s5 + $0xe0] sm:$0xff]
    %v909 = vld [vmem:[%s5 + $0xe8] sm:$0xff]
    %v910 = vld [vmem:[%s5 + $0xf0] sm:$0xff]
    %v911 = vld [vmem:[%s5 + $0xf8] sm:$0xff]
    %v912 = vld [vmem:[%s5 + $0x100] sm:$0xff]
    %v913 = vld [vmem:[%s5 + $0x108] sm:$0xff]
    %v914 = vld [vmem:[%s5 + $0x110] sm:$0xff]
    %v915 = vld [vmem:[%s5 + $0x118] sm:$0xff]
    %v916 = vld [vmem:[%s5 + $0x120] sm:$0xff]
    %v917 = vld [vmem:[%s5 + $0x128] sm:$0xff]
    %v918 = vld [vmem:[%s5 + $0x130] sm:$0xff]
    %v919 = vld [vmem:[%s5 + $0x138] sm:$0xff]
    %v920 = vld [vmem:[%s5 + $0x140] sm:$0xff]
    %v921 = vld [vmem:[%s5 + $0x148] sm:$0xff]
    %v922 = vld [vmem:[%s5 + $0x150] sm:$0xff]
    %v923 = vld [vmem:[%s5 + $0x158] sm:$0xff]
    %v924 = vld [vmem:[%s5 + $0x160] sm:$0xff]
    %v925 = vld [vmem:[%s5 + $0x168] sm:$0xff]
    %v926 = vld [vmem:[%s5 + $0x170] sm:$0xff]
    %v927 = vld [vmem:[%s5 + $0x178] sm:$0xff]
    %v928 = vld [vmem:[%s6] sm:$0x3f]
    %v930 = vperm.slane %v928, 0
    %v931 = vperm.slane %v928, 1
    %v932 = vperm.slane %v928, 2
    %v933 = vperm.slane %v928, 3
    %v934 = vperm.slane %v928, 4
    %v935 = vperm.slane %v928, 5
    %v990 = vunpack.c.l.b16 %v880
    %v991 = vunpack.c.h.b16 %v880
    %v992 = vunpack.c.l.b16 %v881
    %v993 = vunpack.c.h.b16 %v881
    %v994 = vunpack.c.l.b16 %v882
    %v995 = vunpack.c.h.b16 %v882
    %v996 = vunpack.c.l.b16 %v883
    %v997 = vunpack.c.h.b16 %v883
    %v998 = vunpack.c.l.b16 %v884
    %v999 = vunpack.c.h.b16 %v884
    %v1000 = vunpack.c.l.b16 %v885
    %v1001 = vunpack.c.h.b16 %v885
    %v1002 = vunpack.c.l.b16 %v886
    %v1003 = vunpack.c.h.b16 %v886
    %v1004 = vunpack.c.l.b16 %v887
    %v1005 = vunpack.c.h.b16 %v887
    %v1006 = vunpack.c.l.b16 %v888
    %v1007 = vunpack.c.h.b16 %v888
    %v1008 = vunpack.c.l.b16 %v889
    %v1009 = vunpack.c.h.b16 %v889
    %v1010 = vunpack.c.l.b16 %v890
    %v1011 = vunpack.c.h.b16 %v890
    %v1012 = vunpack.c.l.b16 %v891
    %v1013 = vunpack.c.h.b16 %v891
    %v1014 = vunpack.c.l.b16 %v892
    %v1015 = vunpack.c.h.b16 %v892
    %v1016 = vunpack.c.l.b16 %v893
    %v1017 = vunpack.c.h.b16 %v893
    %v1018 = vunpack.c.l.b16 %v894
    %v1019 = vunpack.c.h.b16 %v894
    %v1020 = vunpack.c.l.b16 %v895
    %v1021 = vunpack.c.h.b16 %v895
    %v1022 = vunpack.c.l.b16 %v896
    %v1023 = vunpack.c.h.b16 %v896
    %v1024 = vunpack.c.l.b16 %v897
    %v1025 = vunpack.c.h.b16 %v897
    %v1026 = vunpack.c.l.b16 %v898
    %v1027 = vunpack.c.h.b16 %v898
    %v1028 = vunpack.c.l.b16 %v899
    %v1029 = vunpack.c.h.b16 %v899
    %v1030 = vunpack.c.l.b16 %v900
    %v1031 = vunpack.c.h.b16 %v900
    %v1032 = vunpack.c.l.b16 %v901
    %v1033 = vunpack.c.h.b16 %v901
    %v1034 = vunpack.c.l.b16 %v902
    %v1035 = vunpack.c.h.b16 %v902
    %v1036 = vunpack.c.l.b16 %v903
    %v1037 = vunpack.c.h.b16 %v903
    %v1038 = vunpack.c.l.b16 %v904
    %v1039 = vunpack.c.h.b16 %v904
    %v1040 = vunpack.c.l.b16 %v905
    %v1041 = vunpack.c.h.b16 %v905
    %v1042 = vunpack.c.l.b16 %v906
    %v1043 = vunpack.c.h.b16 %v906
    %v1044 = vunpack.c.l.b16 %v907
    %v1045 = vunpack.c.h.b16 %v907
    %v1046 = vunpack.c.l.b16 %v908
    %v1047 = vunpack.c.h.b16 %v908
    %v1048 = vunpack.c.l.b16 %v909
    %v1049 = vunpack.c.h.b16 %v909
    %v1050 = vunpack.c.l.b16 %v910
    %v1051 = vunpack.c.h.b16 %v910
    %v1052 = vunpack.c.l.b16 %v911
    %v1053 = vunpack.c.h.b16 %v911
    %v1054 = vunpack.c.l.b16 %v912
    %v1055 = vunpack.c.h.b16 %v912
    %v1056 = vunpack.c.l.b16 %v913
    %v1057 = vunpack.c.h.b16 %v913
    %v1058 = vunpack.c.l.b16 %v914
    %v1059 = vunpack.c.h.b16 %v914
    %v1060 = vunpack.c.l.b16 %v915
    %v1061 = vunpack.c.h.b16 %v915
    %v1062 = vunpack.c.l.b16 %v916
    %v1063 = vunpack.c.h.b16 %v916
    %v1064 = vunpack.c.l.b16 %v917
    %v1065 = vunpack.c.h.b16 %v917
    %v1066 = vunpack.c.l.b16 %v918
    %v1067 = vunpack.c.h.b16 %v918
    %v1068 = vunpack.c.l.b16 %v919
    %v1069 = vunpack.c.h.b16 %v919
    %v1070 = vunpack.c.l.b16 %v920
    %v1071 = vunpack.c.h.b16 %v920
    %v1072 = vunpack.c.l.b16 %v921
    %v1073 = vunpack.c.h.b16 %v921
    %v1074 = vunpack.c.l.b16 %v922
    %v1075 = vunpack.c.h.b16 %v922
    %v1076 = vunpack.c.l.b16 %v923
    %v1077 = vunpack.c.h.b16 %v923
    %v1078 = vunpack.c.l.b16 %v924
    %v1079 = vunpack.c.h.b16 %v924
    %v1080 = vunpack.c.l.b16 %v925
    %v1081 = vunpack.c.h.b16 %v925
    %v1082 = vunpack.c.l.b16 %v926
    %v1083 = vunpack.c.h.b16 %v926
    %v1084 = vunpack.c.l.b16 %v927
    %v1085 = vunpack.c.h.b16 %v927
    %v1086 = vpack.c.b16 %v996, %v990
    %v1087 = vpack.c.b16 %v997, %v991
    %v1088 = vpack.c.b16 %v998, %v992
    %v1089 = vpack.c.b16 %v999, %v993
    %v1090 = vpack.c.b16 %v1000, %v994
    %v1091 = vpack.c.b16 %v1001, %v995
    %v1092 = vpack.c.b16 %v1008, %v1002
    %v1093 = vpack.c.b16 %v1009, %v1003
    %v1094 = vpack.c.b16 %v1010, %v1004
    %v1095 = vpack.c.b16 %v1011, %v1005
    %v1096 = vpack.c.b16 %v1012, %v1006
    %v1097 = vpack.c.b16 %v1013, %v1007
    %v1098 = vpack.c.b16 %v1020, %v1014
    %v1099 = vpack.c.b16 %v1021, %v1015
    %v1100 = vpack.c.b16 %v1022, %v1016
    %v1101 = vpack.c.b16 %v1023, %v1017
    %v1102 = vpack.c.b16 %v1024, %v1018
    %v1103 = vpack.c.b16 %v1025, %v1019
    %v1104 = vpack.c.b16 %v1032, %v1026
    %v1105 = vpack.c.b16 %v1033, %v1027
    %v1106 = vpack.c.b16 %v1034, %v1028
    %v1107 = vpack.c.b16 %v1035, %v1029
    %v1108 = vpack.c.b16 %v1036, %v1030
    %v1109 = vpack.c.b16 %v1037, %v1031
    %v1110 = vpack.c.b16 %v1044, %v1038
    %v1111 = vpack.c.b16 %v1045, %v1039
    %v1112 = vpack.c.b16 %v1046, %v1040
    %v1113 = vpack.c.b16 %v1047, %v1041
    %v1114 = vpack.c.b16 %v1048, %v1042
    %v1115 = vpack.c.b16 %v1049, %v1043
    %v1116 = vpack.c.b16 %v1056, %v1050
    %v1117 = vpack.c.b16 %v1057, %v1051
    %v1118 = vpack.c.b16 %v1058, %v1052
    %v1119 = vpack.c.b16 %v1059, %v1053
    %v1120 = vpack.c.b16 %v1060, %v1054
    %v1121 = vpack.c.b16 %v1061, %v1055
    %v1122 = vpack.c.b16 %v1068, %v1062
    %v1123 = vpack.c.b16 %v1069, %v1063
    %v1124 = vpack.c.b16 %v1070, %v1064
    %v1125 = vpack.c.b16 %v1071, %v1065
    %v1126 = vpack.c.b16 %v1072, %v1066
    %v1127 = vpack.c.b16 %v1073, %v1067
    %v1128 = vpack.c.b16 %v1080, %v1074
    %v1129 = vpack.c.b16 %v1081, %v1075
    %v1130 = vpack.c.b16 %v1082, %v1076
    %v1131 = vpack.c.b16 %v1083, %v1077
    %v1132 = vpack.c.b16 %v1084, %v1078
    %v1133 = vpack.c.b16 %v1085, %v1079
    %1182 = vmatpush.bf16.msra.mxu0 %v1128
    %1183 = vmatpush.bf16.msra.mxu0 %v1122
    %1184 = vmatpush.bf16.msra.mxu0 %v1116
    %1185 = vmatpush.bf16.msra.mxu0 %v1110
    %1186 = vmatpush.bf16.msra.mxu0 %v1104
    %1187 = vmatpush.bf16.msra.mxu0 %v1098
    %1188 = vmatpush.bf16.msra.mxu0 %v1092
    %1189 = vmatpush.bf16.msra.mxu0 %v1086
    %1190 = vmatmul.bf16.gmra.mxu0 %v879
    %v1191 = vpop.f32.mrf.mxu0
    %v1192 = vadd.f32 %v930, %v1191
    %v1193 = vpop.f32.mrf.mxu0
    %1194 = vdwg.mxu0
    %1195 = vmatpush.bf16.msra.mxu0 %v1129
    %1196 = vmatpush.bf16.msra.mxu0 %v1123
    %1197 = vmatpush.bf16.msra.mxu0 %v1117
    %1198 = vmatpush.bf16.msra.mxu0 %v1111
    %1199 = vmatpush.bf16.msra.mxu0 %v1105
    %1200 = vmatpush.bf16.msra.mxu0 %v1099
    %1201 = vmatpush.bf16.msra.mxu0 %v1093
    %1202 = vmatpush.bf16.msra.mxu0 %v1087
    %1203 = vmatmul.bf16.gmra.mxu0 %v879
    %v1204 = vpop.f32.mrf.mxu0
    %v1205 = vadd.f32 %v931, %v1204
    %v1206 = vpop.f32.mrf.mxu0
    %1207 = vdwg.mxu0
    %1208 = vmatpush.bf16.msra.mxu0 %v1130
    %1209 = vmatpush.bf16.msra.mxu0 %v1124
    %1210 = vmatpush.bf16.msra.mxu0 %v1118
    %1211 = vmatpush.bf16.msra.mxu0 %v1112
    %1212 = vmatpush.bf16.msra.mxu0 %v1106
    %1213 = vmatpush.bf16.msra.mxu0 %v1100
    %1214 = vmatpush.bf16.msra.mxu0 %v1094
    %1215 = vmatpush.bf16.msra.mxu0 %v1088
    %1216 = vmatmul.bf16.gmra.mxu0 %v879
    %v1217 = vpop.f32.mrf.mxu0
    %v1218 = vadd.f32 %v932, %v1217
    %v1219 = vpop.f32.mrf.mxu0
    %1220 = vdwg.mxu0
    %1221 = vmatpush.bf16.msra.mxu0 %v1131
    %1222 = vmatpush.bf16.msra.mxu0 %v1125
    %1223 = vmatpush.bf16.msra.mxu0 %v1119
    %1224 = vmatpush.bf16.msra.mxu0 %v1113
    %1225 = vmatpush.bf16.msra.mxu0 %v1107
    %1226 = vmatpush.bf16.msra.mxu0 %v1101
    %1227 = vmatpush.bf16.msra.mxu0 %v1095
    %1228 = vmatpush.bf16.msra.mxu0 %v1089
    %1229 = vmatmul.bf16.gmra.mxu0 %v879
    %v1230 = vpop.f32.mrf.mxu0
    %v1231 = vadd.f32 %v933, %v1230
    %v1232 = vpop.f32.mrf.mxu0
    %1233 = vdwg.mxu0
    %1234 = vmatpush.bf16.msra.mxu0 %v1132
    %1235 = vmatpush.bf16.msra.mxu0 %v1126
    %1236 = vmatpush.bf16.msra.mxu0 %v1120
    %1237 = vmatpush.bf16.msra.mxu0 %v1114
    %1238 = vmatpush.bf16.msra.mxu0 %v1108
    %1239 = vmatpush.bf16.msra.mxu0 %v1102
    %1240 = vmatpush.bf16.msra.mxu0 %v1096
    %1241 = vmatpush.bf16.msra.mxu0 %v1090
    %1242 = vmatmul.bf16.gmra.mxu0 %v879
    %v1243 = vpop.f32.mrf.mxu0
    %v1244 = vadd.f32 %v934, %v1243
    %v1245 = vpop.f32.mrf.mxu0
    %1246 = vdwg.mxu0
    %1247 = vmatpush.bf16.msra.mxu0 %v1133
    %1248 = vmatpush.bf16.msra.mxu0 %v1127
    %1249 = vmatpush.bf16.msra.mxu0 %v1121
    %1250 = vmatpush.bf16.msra.mxu0 %v1115
    %1251 = vmatpush.bf16.msra.mxu0 %v1109
    %1252 = vmatpush.bf16.msra.mxu0 %v1103
    %1253 = vmatpush.bf16.msra.mxu0 %v1097
    %1254 = vmatpush.bf16.msra.mxu0 %v1091
    %1255 = vmatmul.bf16.gmra.mxu0 %v879
    %v1256 = vpop.f32.mrf.mxu0
    %v1257 = vadd.f32 %v935, %v1256
    %v1258 = vpop.f32.mrf.mxu0
    %1259 = vdwg.mxu0
    %v1266 = vrot.slane %v1205, 6
    %v1267 = vrot.slane %v1218, 4
    %v1268 = vrot.slane %v1231, 2
    %v1269 = vrot.slane %v1257, 6
    %v1270 = vsel %vm255, %v1192, %v1266
    %vm1271 = vcmask 1045508
    %v1272 = vsel %vm1271, %v1267, %v1268
    %v1273 = vsel %vm257, %v1270, %v1272
    %v1274 = vsel %vm255, %v1244, %v1269
    %1277 = vst [vmem:[#allocation4] sm:$0xff] %v1273
    %1278 = vst [vmem:[#allocation4 + $0x8] sm:$0xf] %v1274
    // Predicated region
    $region30: #{simple_cnn_forward.1} parent=1 // pred_check
      _
    $region31: #{simple_cnn_forward.1} parent=1 // pred_check_branch
      %1280 = sbr.rel (0) target = $region33
    $region32: #{simple_cnn_forward.1} parent=1 // pred_region
      %1282 = vsyncadd [#allocation5], 0
      %s1284 = sshll.u32 [#allocation4], 4
      %s1285 = int_to_ptr.vmem [resolvable:$true] %s1284
      %s1286 = sshll.u32 %s7, 4
      %s1287 = int_to_ptr.hbm [resolvable:$true] %s1286
      %1289 = dma.vmem_to_hbm [thread:$0]  %s1285, 192, %s1287, [#allocation5]
    $region33: #{simple_cnn_forward.1} parent=1 // pred_fallthru
      _
    // Predicated region
    $region34: #{simple_cnn_forward.1} parent=1 // pred_check
      _
    $region35: #{simple_cnn_forward.1} parent=1 // pred_check_branch
      %1291 = sbr.rel (0) target = $region37
    $region36: #{simple_cnn_forward.1} parent=1 // pred_region
      %1293 = dma.done [#allocation5], 192
    $region37: #{simple_cnn_forward.1} parent=1 // pred_fallthru
      _
    %1294 = vsyncpa [#allocation5], 1

</llo_original>
